<compile_context>
chip_gen: v5e
topology: v5e:2x2
jax: 0.10.0
libtpu: 0.0.40
codegen_flags: <defaults>
</compile_context>

<pallas_src>
import math

import jax
import jax.numpy as jnp
from jax.experimental import pallas as pl
from jax.experimental.pallas import tpu as pltpu


# (ph, a) pairs whose zero-padded-original row offset ph + a equals r; the same
# table is used for columns with (pw, b) and offset d = pw + b.
_TAPS_BY_OFFSET = (((0, 0),), ((0, 1), (1, 0)), ((1, 1),))

# Original 3x3 taps kh feeding (output phase ph, sub-tap a); identically kw for
# (pw, b).  Output pixel (2i+ph, 2j+pw) of conv3x3(upsample2x(x)) depends only
# on a 2x2 window of the original image; its effective weights are these sums.
_KGROUPS = (((0,), (1, 2)), ((0, 1), (2,)))


def _patch_layout(C):
    """Column layout of the per-patch concatenated weight slab (C, 16*C)."""
    layout = {}
    off = 0
    for r in range(3):
        for d in range(3):
            phases = []
            for (ph, a) in _TAPS_BY_OFFSET[r]:
                for (pw, b) in _TAPS_BY_OFFSET[d]:
                    phases.append((ph, pw))
            layout[(r, d)] = (off, tuple(phases))
            off += len(phases) * C
    assert off == 16 * C
    return layout


def _make_fused_kernel(tile_h, W, WP, C):
    """Weight-resident kernel: one (batch, row-tile) grid step, 9 MXU dots."""
    M = tile_h * W
    layout = _patch_layout(C)

    def kernel(xm_ref, xh_ref, w_ref, b_ref, o_ref, xt_ref):
        # xm_ref : (1, tile_h, WP, C)      main rows of the padded original image
        # xh_ref : (1, 2,      WP, C)      2-row bottom halo
        # w_ref  : (C, 16*C)               per-patch concatenated weights (resident)
        # b_ref  : (1, C)  f32             bias (resident)
        # o_ref  : (1, tile_h, 2, W, 2*C)  output rows 2*i+ph ; lanes pw*C + c
        # xt_ref : (tile_h + 2, WP, C)     scratch: halo'd input tile
        xt_ref[0:tile_h] = xm_ref[0]
        xt_ref[tile_h:tile_h + 2] = xh_ref[0]

        bias = b_ref[...]                                    # (1, C) f32
        acc = {}                                             # SSA phase accumulators
        for r in range(3):                                   # row offset in padded tile
            rows = xt_ref[r:r + tile_h]                      # (tile_h, WP, C)
            for d in range(3):                               # column offset
                patch = rows[:, d:d + W, :].reshape(M, C)
                off, phases = layout[(r, d)]
                n = len(phases)
                y = jnp.dot(patch, w_ref[:, off:off + n * C],
                            preferred_element_type=jnp.float32)      # (M, n*C)
                for q, p in enumerate(phases):
                    chunk = y[:, q * C:(q + 1) * C]
                    acc[p] = chunk if p not in acc else acc[p] + chunk

        for ph in range(2):
            cols = []
            for pw in range(2):
                v = (acc[(ph, pw)] + bias).reshape(tile_h, W, C)
                cols.append(v.astype(o_ref.dtype))
            row = jnp.concatenate(cols, axis=-1)             # (tile_h, W, 2*C)
            o_ref[:, :, ph:ph + 1, :, :] = row.reshape(1, tile_h, 1, W, 2 * C)

    return kernel


def _make_cout_blocked_kernel(tile_h, W, WP, C, c_blk):
    """Cout-streamed kernel for large C: weights blocked along output channels."""
    M = tile_h * W

    def kernel(xm_ref, xh_ref, w_ref, b_ref, o_ref, xt_ref):
        # w_ref : (16, C, c_blk)      streamed Cout block of the combined taps
        # b_ref : (1, c_blk) f32
        # o_ref : (1, 4, tile_h, W, c_blk)   phase-major (p = 2*ph + pw)
        @pl.when(pl.program_id(2) == 0)      # new row tile -> rebuild halo'd tile
        def _():
            xt_ref[0:tile_h] = xm_ref[0]
            xt_ref[tile_h:tile_h + 2] = xh_ref[0]

        bias = b_ref[...]
        acc = {}
        for r in range(3):
            rows = xt_ref[r:r + tile_h]
            for d in range(3):
                patch = rows[:, d:d + W, :].reshape(M, C)
                for (ph, a) in _TAPS_BY_OFFSET[r]:
                    for (pw, b) in _TAPS_BY_OFFSET[d]:
                        widx = ((ph * 2 + pw) * 2 + a) * 2 + b
                        contrib = jnp.dot(patch, w_ref[widx],
                                          preferred_element_type=jnp.float32)
                        key = (ph, pw)
                        acc[key] = contrib if key not in acc else acc[key] + contrib

        for ph in range(2):
            for pw in range(2):
                v = (acc[(ph, pw)] + bias).reshape(tile_h, W, c_blk)
                o_ref[0, 2 * ph + pw] = v.astype(o_ref.dtype)

    return kernel


def _vmem_plan(vmem_limit_bytes):
    """Generation-aware (tile budget, compiler hard limit) in bytes."""
    try:
        cap = int(pltpu.get_tpu_info().vmem_capacity_bytes)
    except Exception:
        cap = 64 * 1024 * 1024              # conservative fallback
    if cap <= 64 * 1024 * 1024:             # v7x-class: leave compiler headroom
        budget, limit = int(cap * 0.45), int(cap * 0.625)
    else:                                   # 128-MiB parts (v5e / v6e)
        budget, limit = int(cap * 0.65), int(cap * 0.75)
    if vmem_limit_bytes is not None:
        limit = int(vmem_limit_bytes)
        budget = min(budget, int(limit * 0.75))
    return budget, limit


def _pick_tile_h(B, H, estimate, budget, max_tile=128):
    """Largest even row tile dividing H that fits the VMEM budget; prefers an
    even number of (batch x row-tile) parallel steps so both v7x TCs get work."""
    cands = [t for t in range(2, min(H, max_tile) + 1, 2) if H % t == 0]
    if not cands:
        return H
    fitting = [t for t in cands if estimate(t) <= budget]
    pool = fitting if fitting else [min(cands)]
    good = [t for t in pool if B * (H // t) >= 2 and (B * (H // t)) % 2 == 0]
    return max(good) if good else max(pool)


def upsample_forward(x_nchw, weight_oihw, bias, *, compute_dtype=jnp.bfloat16,
                     tile_h=None, cout_block=None, vmem_limit_bytes=None,
                     data_format="NCHW"):
    """Pallas equivalent of Upsample.forward.

    x_nchw      : (B, C, H, W)
    weight_oihw : (C, C, 3, 3)   PyTorch Conv2d weight layout (O, I, KH, KW)
    bias        : (C,)
    data_format : "NCHW" (PyTorch convention) or "NHWC" (free output layout)
    returns     : (B, C, 2H, 2W) for NCHW, (B, 2H, 2W, C) for NHWC
    """
    B, C, H, W = x_nchw.shape
    if weight_oihw.shape != (C, C, 3, 3):
        raise ValueError(f"bad weight shape {weight_oihw.shape}")
    if bias.shape != (C,):
        raise ValueError(f"bad bias shape {bias.shape}")
    if H % 2 != 0:
        raise ValueError("H must be even (row tiles come in output-row pairs)")
    if data_format not in ("NCHW", "NHWC"):
        raise ValueError(f"bad data_format {data_format!r}")

    out_dtype = x_nchw.dtype
    cdtype = jnp.dtype(compute_dtype) if compute_dtype is not None else jnp.dtype(out_dtype)
    in_isz = cdtype.itemsize
    out_isz = jnp.dtype(out_dtype).itemsize
    WP = W + 2
    budget, vmem_limit = _vmem_plan(vmem_limit_bytes)

    # ---- combined sub-pixel weights (f32 sums, single cast to compute dtype) --
    wk = jnp.transpose(weight_oihw, (2, 3, 1, 0)).astype(jnp.float32)   # (3,3,Ci,Co)

    def tap_mat(ph, a, pw, b):
        m = jnp.zeros((C, C), jnp.float32)
        for kh in _KGROUPS[ph][a]:
            for kw in _KGROUPS[pw][b]:
                m = m + wk[kh, kw]
        return m

    bvec = bias.reshape(1, C).astype(jnp.float32)

    # ---- choose weight-resident vs Cout-streamed path --------------------------
    resident_w_bytes = 16 * C * C * in_isz
    use_blocked = (cout_block is not None) or (resident_w_bytes > budget // 3)
    c_blk = C
    if use_blocked:
        if cout_block is not None:
            c_blk = int(cout_block)
        else:
            divisors = [d for d in range(128, C + 1, 128) if C % d == 0]
            if not divisors:
                raise ValueError(
                    f"combined weights ({resident_w_bytes} B) exceed the VMEM budget "
                    f"and C={C} is not a multiple of 128; pass cout_block=")
            cap = max(budget // 3, 2 * 16 * C * 128 * in_isz)
            c_blk = max(d for d in divisors if 2 * 16 * C * d * in_isz <= cap)
        if c_blk != C and (C % c_blk != 0 or c_blk % 128 != 0):
            raise ValueError(f"cout_block={c_blk} must divide C={C} and be a "
                             f"multiple of 128")

    # ---- per-step VMEM footprint estimates (incl. double buffering) -----------
    def est_fused(th):
        return (2 * th * WP * C * in_isz                 # main input window
                + 2 * 2 * WP * C * in_isz                # halo window
                + 2 * th * 2 * W * 2 * C * out_isz       # output block
                + (th + 2) * WP * C * in_isz             # halo'd scratch tile
                + 8 * th * W * C * 4                     # f32 accumulators / dot result
                + resident_w_bytes + 8 * C)

    def est_blocked(th):
        return (2 * th * WP * C * in_isz
                + 2 * 2 * WP * C * in_isz
                + 2 * 4 * th * W * c_blk * out_isz
                + (th + 2) * WP * C * in_isz
                + 2 * 16 * C * c_blk * in_isz            # streamed weight block
                + 5 * th * W * c_blk * 4
                + 8 * c_blk)

    if tile_h is None:
        tile_h = _pick_tile_h(B, H, est_blocked if use_blocked else est_fused, budget)
    tile_h = int(tile_h)
    if tile_h % 2 != 0 or H % tile_h != 0:
        raise ValueError(f"tile_h={tile_h} must be even and divide H={H}")
    n_tiles = H // tile_h
    half_tile = tile_h // 2

    # ---- NCHW -> NHWC, cast to MXU operand dtype, 1px zero pad ----------------
    # TODO(synk): the 1px zero pad is still an XLA copy of the (small) original-
    # resolution input; in-kernel border masking would remove that HBM round trip.
    x = jnp.transpose(x_nchw, (0, 2, 3, 1)).astype(cdtype)
    x_pad = jnp.pad(x, ((0, 0), (1, 1), (1, 1), (0, 0)))    # (B, H+2, WP, C)

    if not use_blocked:
        # ---- weight-resident path: NHWC-native output -------------------------
        w_cat = jnp.concatenate(
            [tap_mat(ph, a, pw, b)
             for r in range(3) for d in range(3)
             for (ph, a) in _TAPS_BY_OFFSET[r]
             for (pw, b) in _TAPS_BY_OFFSET[d]], axis=1).astype(cdtype)   # (C, 16C)
        out5 = pl.pallas_call(
            _make_fused_kernel(tile_h, W, WP, C),
            out_shape=jax.ShapeDtypeStruct((B, H, 2, W, 2 * C), out_dtype),
            grid=(B, n_tiles),
            in_specs=[
                pl.BlockSpec((1, tile_h, WP, C), lambda bi, ti: (bi, ti, 0, 0)),
                pl.BlockSpec((1, 2, WP, C),
                             lambda bi, ti: (bi, (ti + 1) * half_tile, 0, 0)),
                pl.BlockSpec(memory_space=pltpu.MemorySpace.VMEM),
                pl.BlockSpec(memory_space=pltpu.MemorySpace.VMEM),
            ],
            out_specs=pl.BlockSpec((1, tile_h, 2, W, 2 * C),
                                   lambda bi, ti: (bi, ti, 0, 0, 0)),
            scratch_shapes=[pltpu.VMEM((tile_h + 2, WP, C), cdtype)],
            compiler_params=pltpu.CompilerParams(
                dimension_semantics=("parallel", "parallel"),
                vmem_limit_bytes=int(vmem_limit)),
        )(x_pad, x_pad, w_cat, bvec)
        out_nhwc = out5.reshape(B, 2 * H, 2 * W, C)      # free row-major reshape
    else:
        # ---- Cout-streamed path (large C, small spatial) -----------------------
        taps16 = [tap_mat(ph, a, pw, b)
                  for ph in range(2) for pw in range(2)
                  for a in range(2) for b in range(2)]
        w_stack = jnp.stack(taps16, axis=0).astype(cdtype)    # (16, C, C)
        out_phase = pl.pallas_call(
            _make_cout_blocked_kernel(tile_h, W, WP, C, c_blk),
            out_shape=jax.ShapeDtypeStruct((B, 4, H, W, C), out_dtype),
            grid=(B, n_tiles, C // c_blk),
            in_specs=[
                pl.BlockSpec((1, tile_h, WP, C), lambda bi, ti, ci: (bi, ti, 0, 0)),
                pl.BlockSpec((1, 2, WP, C),
                             lambda bi, ti, ci: (bi, (ti + 1) * half_tile, 0, 0)),
                pl.BlockSpec((16, C, c_blk), lambda bi, ti, ci: (0, 0, ci)),
                pl.BlockSpec((1, c_blk), lambda bi, ti, ci: (0, ci)),
            ],
            out_specs=pl.BlockSpec((1, 4, tile_h, W, c_blk),
                                   lambda bi, ti, ci: (bi, 0, ti, 0, ci)),
            scratch_shapes=[pltpu.VMEM((tile_h + 2, WP, C), cdtype)],
            compiler_params=pltpu.CompilerParams(
                dimension_semantics=("parallel", "parallel", "arbitrary"),
                vmem_limit_bytes=int(vmem_limit)),
        )(x_pad, x_pad, w_stack, bvec)
        # Phase-major -> NHWC.  These layers are small-spatial, so this transpose
        # touches little HBM compared with the main-path layers.
        out_nhwc = (out_phase.reshape(B, 2, 2, H, W, C)
                    .transpose(0, 3, 1, 4, 2, 5)
                    .reshape(B, 2 * H, 2 * W, C))

    if data_format == "NHWC":
        return out_nhwc
    return jnp.transpose(out_nhwc, (0, 3, 1, 2))


def _reference(x_nchw, weight_oihw, bias):
    """Pure-JAX reference matching the PyTorch module semantics."""
    x_up = jnp.repeat(jnp.repeat(x_nchw, 2, axis=2), 2, axis=3)
    out = jax.lax.conv_general_dilated(
        x_up, weight_oihw, window_strides=(1, 1), padding=((1, 1), (1, 1)),
        dimension_numbers=("NCHW", "OIHW", "NCHW"))
    return out + bias[None, :, None, None]


if __name__ == "__main__":
    key = jax.random.PRNGKey(0)
    k1, k2, k3, k4, k5, k6 = jax.random.split(key, 6)

    # Inputs are quantized to short dyadic mantissas so every bf16-operand /
    # f32-accumulate product is exact and the checks are backend-precision
    # independent.

    # ---- small config: exercises the fused (weight-resident) NHWC-native path --
    B, C, H, W = 2, 4, 16, 16
    x = jnp.round(jax.random.normal(k1, (B, C, H, W), jnp.float32) * 8.0) / 8.0
    bound = 1.0 / math.sqrt(C * 9)
    weight = jnp.round(
        jax.random.uniform(k2, (C, C, 3, 3), jnp.float32, -bound, bound) * 256.0) / 256.0
    bias = jnp.round(
        jax.random.uniform(k3, (C,), jnp.float32, -bound, bound) * 256.0) / 256.0
    ref = _reference(x, weight, bias)

    # 1) exact f32-operand path, forced small row tile so the multi-tile halo
    #    logic is exercised (grid = (2, 4)).
    out_f32 = jax.block_until_ready(
        upsample_forward(x, weight, bias, compute_dtype=jnp.float32, tile_h=4))
    assert out_f32.shape == (B, C, 2 * H, 2 * W), out_f32.shape
    err_f32 = float(jnp.max(jnp.abs(out_f32 - ref)))
    assert err_f32 < 1e-4, err_f32

    # 2) production configuration: bf16 MXU operands, f32 accumulation, auto tile.
    out_bf16 = jax.block_until_ready(upsample_forward(x, weight, bias))
    assert out_bf16.shape == (B, C, 2 * H, 2 * W), out_bf16.shape
    err_bf16 = float(jnp.max(jnp.abs(out_bf16 - ref)))
    assert err_bf16 < 1e-3, err_bf16

    # ---- larger-C config: exercises the Cout-streamed path + free NHWC output --
    B2, C2, H2, W2 = 1, 256, 8, 8
    x2 = jnp.round(jax.random.normal(k4, (B2, C2, H2, W2), jnp.float32) * 8.0) / 8.0
    bound2 = 1.0 / math.sqrt(C2 * 9)
    w2 = jnp.round(
        jax.random.uniform(k5, (C2, C2, 3, 3), jnp.float32, -bound2, bound2) * 256.0) / 256.0
    b2 = jnp.round(
        jax.random.uniform(k6, (C2,), jnp.float32, -bound2, bound2) * 256.0) / 256.0
    ref2 = _reference(x2, w2, b2)
    out2 = jax.block_until_ready(
        upsample_forward(x2, w2, b2, cout_block=128, tile_h=4, data_format="NHWC"))
    assert out2.shape == (B2, 2 * H2, 2 * W2, C2), out2.shape
    err2 = float(jnp.max(jnp.abs(jnp.transpose(out2, (0, 3, 1, 2)) - ref2)))
    assert err2 < 2e-3, err2

    print("KERNEL_OK")
</pallas_src>

<mosaic_0001>
module attributes {stable_mosaic.version = 11 : i64} {
  func.func @kernel(%arg0: i32, %arg1: i32, %arg2: memref<1x4x18x4xf32, #tpu.memory_space<vmem>>, %arg3: memref<1x2x18x4xf32, #tpu.memory_space<vmem>>, %arg4: memref<4x64xf32, #tpu.memory_space<vmem>>, %arg5: memref<1x4xf32, #tpu.memory_space<vmem>>, %arg6: memref<1x4x2x16x8xf32, #tpu.memory_space<vmem>>, %arg7: memref<6x18x4xf32, #tpu.memory_space<vmem>>) attributes {dimension_semantics = [#tpu.dimension_semantics<parallel>, #tpu.dimension_semantics<parallel>], iteration_bounds = array<i64: 2, 4>, scalar_prefetch = 0 : i64, scratch_operands = 1 : i64, tpu.core_type = #tpu.core_type<tc>, window_params = [{transform_indices = @transform_0, window_bounds = array<i64: 1, 4, 18, 4>}, {transform_indices = @transform_1, window_bounds = array<i64: 1, 2, 18, 4>}, {pipeline_mode = #tpu.pipeline_mode<synchronous>, transform_indices = @transform_2, window_bounds = array<i64: 4, 64>}, {pipeline_mode = #tpu.pipeline_mode<synchronous>, transform_indices = @transform_3, window_bounds = array<i64: 1, 4>}, {transform_indices = @transform_4, window_bounds = array<i64: 1, 4, 2, 16, 8>}]} {
    %c0 = arith.constant 0 : index
    %c0_0 = arith.constant 0 : index
    %c0_1 = arith.constant 0 : index
    %c0_2 = arith.constant 0 : index
    %0 = vector.load %arg2[%c0, %c0_0, %c0_1, %c0_2] : memref<1x4x18x4xf32, #tpu.memory_space<vmem>>, vector<1x4x18x4xf32>
    %1 = vector.shape_cast %0 : vector<1x4x18x4xf32> to vector<4x18x4xf32>
    %c0_3 = arith.constant 0 : index
    %c0_4 = arith.constant 0 : index
    %c0_5 = arith.constant 0 : index
    %2 = vector.load %arg7[%c0_3, %c0_4, %c0_5] : memref<6x18x4xf32, #tpu.memory_space<vmem>>, vector<4x18x4xf32>
    tpu.vector_store %arg7[%c0_3, %c0_4, %c0_5], %1 {strides = array<i32>} : memref<6x18x4xf32, #tpu.memory_space<vmem>>, vector<4x18x4xf32>,
    %c0_6 = arith.constant 0 : index
    %c0_7 = arith.constant 0 : index
    %c0_8 = arith.constant 0 : index
    %c0_9 = arith.constant 0 : index
    %3 = vector.load %arg3[%c0_6, %c0_7, %c0_8, %c0_9] : memref<1x2x18x4xf32, #tpu.memory_space<vmem>>, vector<1x2x18x4xf32>
    %4 = vector.shape_cast %3 : vector<1x2x18x4xf32> to vector<2x18x4xf32>
    %c4 = arith.constant 4 : index
    %c0_10 = arith.constant 0 : index
    %c0_11 = arith.constant 0 : index
    %5 = vector.load %arg7[%c4, %c0_10, %c0_11] : memref<6x18x4xf32, #tpu.memory_space<vmem>>, vector<2x18x4xf32>
    tpu.vector_store %arg7[%c4, %c0_10, %c0_11], %4 {strides = array<i32>} : memref<6x18x4xf32, #tpu.memory_space<vmem>>, vector<2x18x4xf32>,
    %c0_12 = arith.constant 0 : index
    %c0_13 = arith.constant 0 : index
    %6 = vector.load %arg5[%c0_12, %c0_13] : memref<1x4xf32, #tpu.memory_space<vmem>>, vector<1x4xf32>
    %c0_14 = arith.constant 0 : index
    %c0_15 = arith.constant 0 : index
    %c0_16 = arith.constant 0 : index
    %7 = vector.load %arg7[%c0_14, %c0_15, %c0_16] : memref<6x18x4xf32, #tpu.memory_space<vmem>>, vector<4x18x4xf32>
    %8 = vector.extract_strided_slice %7 {offsets = [0, 0, 0], sizes = [4, 16, 4], strides = [1, 1, 1]} : vector<4x18x4xf32> to vector<4x16x4xf32>
    %9 = vector.shape_cast %8 : vector<4x16x4xf32> to vector<64x4xf32>
    %c0_17 = arith.constant 0 : index
    %c0_18 = arith.constant 0 : index
    %10 = vector.load %arg4[%c0_17, %c0_18] : memref<4x64xf32, #tpu.memory_space<vmem>>, vector<4x4xf32>
    %cst = arith.constant dense<0.000000e+00> : vector<64x4xf32>
    %11 = tpu.matmul %9, %10, %cst {dimension_numbers = #tpu.dot_dimension_numbers<[1], [0], [0], [1], [0, 0, 1, 1], [], []>} : vector<64x4xf32>, vector<4x4xf32>, vector<64x4xf32> -> vector<64x4xf32>
    %12 = vector.extract_strided_slice %7 {offsets = [0, 1, 0], sizes = [4, 16, 4], strides = [1, 1, 1]} : vector<4x18x4xf32> to vector<4x16x4xf32>
    %13 = vector.shape_cast %12 : vector<4x16x4xf32> to vector<64x4xf32>
    %c0_19 = arith.constant 0 : index
    %c4_20 = arith.constant 4 : index
    %14 = vector.load %arg4[%c0_19, %c4_20] : memref<4x64xf32, #tpu.memory_space<vmem>>, vector<4x8xf32>
    %cst_21 = arith.constant dense<0.000000e+00> : vector<64x8xf32>
    %15 = tpu.matmul %13, %14, %cst_21 {dimension_numbers = #tpu.dot_dimension_numbers<[1], [0], [0], [1], [0, 0, 1, 1], [], []>} : vector<64x4xf32>, vector<4x8xf32>, vector<64x8xf32> -> vector<64x8xf32>
    %16 = vector.extract_strided_slice %15 {offsets = [0, 0], sizes = [64, 4], strides = [1, 1]} : vector<64x8xf32> to vector<64x4xf32>
    %17 = arith.addf %11, %16 : vector<64x4xf32>
    %18 = vector.extract_strided_slice %15 {offsets = [0, 4], sizes = [64, 4], strides = [1, 1]} : vector<64x8xf32> to vector<64x4xf32>
    %19 = vector.extract_strided_slice %7 {offsets = [0, 2, 0], sizes = [4, 16, 4], strides = [1, 1, 1]} : vector<4x18x4xf32> to vector<4x16x4xf32>
    %20 = vector.shape_cast %19 : vector<4x16x4xf32> to vector<64x4xf32>
    %c0_22 = arith.constant 0 : index
    %c12 = arith.constant 12 : index
    %21 = vector.load %arg4[%c0_22, %c12] : memref<4x64xf32, #tpu.memory_space<vmem>>, vector<4x4xf32>
    %cst_23 = arith.constant dense<0.000000e+00> : vector<64x4xf32>
    %22 = tpu.matmul %20, %21, %cst_23 {dimension_numbers = #tpu.dot_dimension_numbers<[1], [0], [0], [1], [0, 0, 1, 1], [], []>} : vector<64x4xf32>, vector<4x4xf32>, vector<64x4xf32> -> vector<64x4xf32>
    %23 = arith.addf %18, %22 : vector<64x4xf32>
    %c1 = arith.constant 1 : index
    %c0_24 = arith.constant 0 : index
    %c0_25 = arith.constant 0 : index
    %24 = vector.load %arg7[%c1, %c0_24, %c0_25] : memref<6x18x4xf32, #tpu.memory_space<vmem>>, vector<4x18x4xf32>
    %25 = vector.extract_strided_slice %24 {offsets = [0, 0, 0], sizes = [4, 16, 4], strides = [1, 1, 1]} : vector<4x18x4xf32> to vector<4x16x4xf32>
    %26 = vector.shape_cast %25 : vector<4x16x4xf32> to vector<64x4xf32>
    %c0_26 = arith.constant 0 : index
    %c16 = arith.constant 16 : index
    %27 = vector.load %arg4[%c0_26, %c16] : memref<4x64xf32, #tpu.memory_space<vmem>>, vector<4x8xf32>
    %cst_27 = arith.constant dense<0.000000e+00> : vector<64x8xf32>
    %28 = tpu.matmul %26, %27, %cst_27 {dimension_numbers = #tpu.dot_dimension_numbers<[1], [0], [0], [1], [0, 0, 1, 1], [], []>} : vector<64x4xf32>, vector<4x8xf32>, vector<64x8xf32> -> vector<64x8xf32>
    %29 = vector.extract_strided_slice %28 {offsets = [0, 0], sizes = [64, 4], strides = [1, 1]} : vector<64x8xf32> to vector<64x4xf32>
    %30 = arith.addf %17, %29 : vector<64x4xf32>
    %31 = vector.extract_strided_slice %28 {offsets = [0, 4], sizes = [64, 4], strides = [1, 1]} : vector<64x8xf32> to vector<64x4xf32>
    %32 = vector.extract_strided_slice %24 {offsets = [0, 1, 0], sizes = [4, 16, 4], strides = [1, 1, 1]} : vector<4x18x4xf32> to vector<4x16x4xf32>
    %33 = vector.shape_cast %32 : vector<4x16x4xf32> to vector<64x4xf32>
    %c0_28 = arith.constant 0 : index
    %c24 = arith.constant 24 : index
    %34 = vector.load %arg4[%c0_28, %c24] : memref<4x64xf32, #tpu.memory_space<vmem>>, vector<4x16xf32>
    %cst_29 = arith.constant dense<0.000000e+00> : vector<64x16xf32>
    %35 = tpu.matmul %33, %34, %cst_29 {dimension_numbers = #tpu.dot_dimension_numbers<[1], [0], [0], [1], [0, 0, 1, 1], [], []>} : vector<64x4xf32>, vector<4x16xf32>, vector<64x16xf32> -> vector<64x16xf32>
    %36 = vector.extract_strided_slice %35 {offsets = [0, 0], sizes = [64, 4], strides = [1, 1]} : vector<64x16xf32> to vector<64x4xf32>
    %37 = arith.addf %30, %36 : vector<64x4xf32>
    %38 = vector.extract_strided_slice %35 {offsets = [0, 4], sizes = [64, 4], strides = [1, 1]} : vector<64x16xf32> to vector<64x4xf32>
    %39 = arith.addf %23, %38 : vector<64x4xf32>
    %40 = vector.extract_strided_slice %35 {offsets = [0, 8], sizes = [64, 4], strides = [1, 1]} : vector<64x16xf32> to vector<64x4xf32>
    %41 = arith.addf %31, %40 : vector<64x4xf32>
    %42 = vector.extract_strided_slice %35 {offsets = [0, 12], sizes = [64, 4], strides = [1, 1]} : vector<64x16xf32> to vector<64x4xf32>
    %43 = vector.extract_strided_slice %24 {offsets = [0, 2, 0], sizes = [4, 16, 4], strides = [1, 1, 1]} : vector<4x18x4xf32> to vector<4x16x4xf32>
    %44 = vector.shape_cast %43 : vector<4x16x4xf32> to vector<64x4xf32>
    %c0_30 = arith.constant 0 : index
    %c40 = arith.constant 40 : index
    %45 = vector.load %arg4[%c0_30, %c40] : memref<4x64xf32, #tpu.memory_space<vmem>>, vector<4x8xf32>
    %cst_31 = arith.constant dense<0.000000e+00> : vector<64x8xf32>
    %46 = tpu.matmul %44, %45, %cst_31 {dimension_numbers = #tpu.dot_dimension_numbers<[1], [0], [0], [1], [0, 0, 1, 1], [], []>} : vector<64x4xf32>, vector<4x8xf32>, vector<64x8xf32> -> vector<64x8xf32>
    %47 = vector.extract_strided_slice %46 {offsets = [0, 0], sizes = [64, 4], strides = [1, 1]} : vector<64x8xf32> to vector<64x4xf32>
    %48 = arith.addf %39, %47 : vector<64x4xf32>
    %49 = vector.extract_strided_slice %46 {offsets = [0, 4], sizes = [64, 4], strides = [1, 1]} : vector<64x8xf32> to vector<64x4xf32>
    %50 = arith.addf %42, %49 : vector<64x4xf32>
    %c2 = arith.constant 2 : index
    %c0_32 = arith.constant 0 : index
    %c0_33 = arith.constant 0 : index
    %51 = vector.load %arg7[%c2, %c0_32, %c0_33] : memref<6x18x4xf32, #tpu.memory_space<vmem>>, vector<4x18x4xf32>
    %52 = vector.extract_strided_slice %51 {offsets = [0, 0, 0], sizes = [4, 16, 4], strides = [1, 1, 1]} : vector<4x18x4xf32> to vector<4x16x4xf32>
    %53 = vector.shape_cast %52 : vector<4x16x4xf32> to vector<64x4xf32>
    %c0_34 = arith.constant 0 : index
    %c48 = arith.constant 48 : index
    %54 = vector.load %arg4[%c0_34, %c48] : memref<4x64xf32, #tpu.memory_space<vmem>>, vector<4x4xf32>
    %cst_35 = arith.constant dense<0.000000e+00> : vector<64x4xf32>
    %55 = tpu.matmul %53, %54, %cst_35 {dimension_numbers = #tpu.dot_dimension_numbers<[1], [0], [0], [1], [0, 0, 1, 1], [], []>} : vector<64x4xf32>, vector<4x4xf32>, vector<64x4xf32> -> vector<64x4xf32>
    %56 = arith.addf %41, %55 : vector<64x4xf32>
    %57 = vector.extract_strided_slice %51 {offsets = [0, 1, 0], sizes = [4, 16, 4], strides = [1, 1, 1]} : vector<4x18x4xf32> to vector<4x16x4xf32>
    %58 = vector.shape_cast %57 : vector<4x16x4xf32> to vector<64x4xf32>
    %c0_36 = arith.constant 0 : index
    %c52 = arith.constant 52 : index
    %59 = vector.load %arg4[%c0_36, %c52] : memref<4x64xf32, #tpu.memory_space<vmem>>, vector<4x8xf32>
    %cst_37 = arith.constant dense<0.000000e+00> : vector<64x8xf32>
    %60 = tpu.matmul %58, %59, %cst_37 {dimension_numbers = #tpu.dot_dimension_numbers<[1], [0], [0], [1], [0, 0, 1, 1], [], []>} : vector<64x4xf32>, vector<4x8xf32>, vector<64x8xf32> -> vector<64x8xf32>
    %61 = vector.extract_strided_slice %60 {offsets = [0, 0], sizes = [64, 4], strides = [1, 1]} : vector<64x8xf32> to vector<64x4xf32>
    %62 = arith.addf %56, %61 : vector<64x4xf32>
    %63 = vector.extract_strided_slice %60 {offsets = [0, 4], sizes = [64, 4], strides = [1, 1]} : vector<64x8xf32> to vector<64x4xf32>
    %64 = arith.addf %50, %63 : vector<64x4xf32>
    %65 = vector.extract_strided_slice %51 {offsets = [0, 2, 0], sizes = [4, 16, 4], strides = [1, 1, 1]} : vector<4x18x4xf32> to vector<4x16x4xf32>
    %66 = vector.shape_cast %65 : vector<4x16x4xf32> to vector<64x4xf32>
    %c0_38 = arith.constant 0 : index
    %c60 = arith.constant 60 : index
    %67 = vector.load %arg4[%c0_38, %c60] : memref<4x64xf32, #tpu.memory_space<vmem>>, vector<4x4xf32>
    %cst_39 = arith.constant dense<0.000000e+00> : vector<64x4xf32>
    %68 = tpu.matmul %66, %67, %cst_39 {dimension_numbers = #tpu.dot_dimension_numbers<[1], [0], [0], [1], [0, 0, 1, 1], [], []>} : vector<64x4xf32>, vector<4x4xf32>, vector<64x4xf32> -> vector<64x4xf32>
    %69 = arith.addf %64, %68 : vector<64x4xf32>
    %70 = vector.broadcast %6 : vector<1x4xf32> to vector<64x4xf32>
    %71 = arith.addf %37, %70 : vector<64x4xf32>
    %72 = vector.shape_cast %71 : vector<64x4xf32> to vector<4x16x4xf32>
    %73 = vector.broadcast %6 : vector<1x4xf32> to vector<64x4xf32>
    %74 = arith.addf %48, %73 : vector<64x4xf32>
    %75 = vector.shape_cast %74 : vector<64x4xf32> to vector<4x16x4xf32>
    %76 = tpu.concatenate %72, %75 in 2 : vector<4x16x4xf32>, vector<4x16x4xf32> -> vector<4x16x8xf32>
    %77 = vector.shape_cast %76 : vector<4x16x8xf32> to vector<1x4x1x16x8xf32>
    %c0_40 = arith.constant 0 : index
    %c0_41 = arith.constant 0 : index
    %c0_42 = arith.constant 0 : index
    %c0_43 = arith.constant 0 : index
    %c0_44 = arith.constant 0 : index
    %78 = vector.load %arg6[%c0_40, %c0_41, %c0_42, %c0_43, %c0_44] : memref<1x4x2x16x8xf32, #tpu.memory_space<vmem>>, vector<1x4x1x16x8xf32>
    tpu.vector_store %arg6[%c0_40, %c0_41, %c0_42, %c0_43, %c0_44], %77 {strides = array<i32>} : memref<1x4x2x16x8xf32, #tpu.memory_space<vmem>>, vector<1x4x1x16x8xf32>,
    %79 = vector.broadcast %6 : vector<1x4xf32> to vector<64x4xf32>
    %80 = arith.addf %62, %79 : vector<64x4xf32>
    %81 = vector.shape_cast %80 : vector<64x4xf32> to vector<4x16x4xf32>
    %82 = vector.broadcast %6 : vector<1x4xf32> to vector<64x4xf32>
    %83 = arith.addf %69, %82 : vector<64x4xf32>
    %84 = vector.shape_cast %83 : vector<64x4xf32> to vector<4x16x4xf32>
    %85 = tpu.concatenate %81, %84 in 2 : vector<4x16x4xf32>, vector<4x16x4xf32> -> vector<4x16x8xf32>
    %86 = vector.shape_cast %85 : vector<4x16x8xf32> to vector<1x4x1x16x8xf32>
    %c0_45 = arith.constant 0 : index
    %c0_46 = arith.constant 0 : index
    %c1_47 = arith.constant 1 : index
    %c0_48 = arith.constant 0 : index
    %c0_49 = arith.constant 0 : index
    %87 = vector.load %arg6[%c0_45, %c0_46, %c1_47, %c0_48, %c0_49] : memref<1x4x2x16x8xf32, #tpu.memory_space<vmem>>, vector<1x4x1x16x8xf32>
    tpu.vector_store %arg6[%c0_45, %c0_46, %c1_47, %c0_48, %c0_49], %86 {strides = array<i32>} : memref<1x4x2x16x8xf32, #tpu.memory_space<vmem>>, vector<1x4x1x16x8xf32>,
    return
  }
  func.func @transform_0(%arg0: i32, %arg1: i32) -> (i32, i32, i32, i32) {
    %c0_i32 = arith.constant 0 : i32
    %c0_i32_0 = arith.constant 0 : i32
    %c0_i32_1 = arith.constant 0 : i32
    return %arg0, %arg1, %c0_i32, %c0_i32_0 : i32, i32, i32, i32
  }
  func.func @transform_1(%arg0: i32, %arg1: i32) -> (i32, i32, i32, i32) {
    %c1_i32 = arith.constant 1 : i32
    %0 = arith.addi %arg1, %c1_i32 : i32
    %c2_i32 = arith.constant 2 : i32
    %1 = arith.muli %0, %c2_i32 : i32
    %c0_i32 = arith.constant 0 : i32
    %c0_i32_0 = arith.constant 0 : i32
    %c0_i32_1 = arith.constant 0 : i32
    return %arg0, %1, %c0_i32, %c0_i32_0 : i32, i32, i32, i32
  }
  func.func @transform_2(%arg0: i32, %arg1: i32) -> (i32, i32) {
    %c0_i32 = arith.constant 0 : i32
    %c0_i32_0 = arith.constant 0 : i32
    %c0_i32_1 = arith.constant 0 : i32
    return %c0_i32, %c0_i32_0 : i32, i32
  }
  func.func @transform_3(%arg0: i32, %arg1: i32) -> (i32, i32) {
    %c0_i32 = arith.constant 0 : i32
    %c0_i32_0 = arith.constant 0 : i32
    %c0_i32_1 = arith.constant 0 : i32
    return %c0_i32, %c0_i32_0 : i32, i32
  }
  func.func @transform_4(%arg0: i32, %arg1: i32) -> (i32, i32, i32, i32, i32) {
    %c0_i32 = arith.constant 0 : i32
    %c0_i32_0 = arith.constant 0 : i32
    %c0_i32_1 = arith.constant 0 : i32
    %c0_i32_2 = arith.constant 0 : i32
    return %arg0, %arg1, %c0_i32, %c0_i32_0, %c0_i32_1 : i32, i32, i32, i32, i32
  }
}

</mosaic_0001>

<llo_original>
// kernel: tpu_custom_call.1
$region0: #{tpu_custom_call.1}
  #allocation0 [shape = 'u32[]', space=smem, size = 0x4, offset = 0x4, fixed_abs, tag = 'smem constant byte address 0x4 - core index']
  #allocation1 [shape = 'u32[72,128]{1,0:T(1,128)}', space=vmem, size = 0x9000, scoped, tag = 'internal scratch']
  #allocation2 [shape = 'f32[6,18,4]{2,1,0:T(8,128)}', space=vmem, size = 0x12000, scoped, tag = 'scratch operand']
  %s0 = inlined_call_operand.vmem [shape: f32[2,18,18,4], index: 0, kind: input, shape index: {}]
  %s1 = inlined_call_operand.vmem [shape: f32[2,18,18,4], index: 1, kind: input, shape index: {}]
  %s2 = inlined_call_operand.vmem [shape: f32[4,64], index: 2, kind: input, shape index: {}]
  %s3 = inlined_call_operand.vmem [shape: f32[1,4], index: 3, kind: input, shape index: {}]
  %s4 = inlined_call_operand.vmem [shape: f32[2,16,2,16,8], index: 4, kind: output, shape index: {}]
  %s5 = sld [smem:[#allocation0]]
  $region49: #{tpu_custom_call.1} parent=0
    _
  %s7 = ssub.s32 1, %s5
  %s8 = scalar_select 0, %s7, %s5
  loop: start=0, step=1, limit=10
  $region2: #{tpu_custom_call.1} parent=0 // loop_pre_header
    _
  $region3: #{tpu_custom_call.1} parent=0 // loop_header
    %s10 = sphi 0, %s14
    %p11 = scmp.ge.s32.totalorder %s10, 10
    %s17 = sphi 0, %s29
    %s18 = sphi 0, %s25
    %s19 = sphi 0, %s17
    %s20 = sphi 0, %s18
    %s21 = sphi 0, %s19
    %s22 = sphi 0, %s20
    %s34 = sphi 0, %s36
    %s37 = sphi 0, %s34
    %s38 = sphi 0, %s37
    %s54 = sphi 0, %s38
    %s66 = sphi 0, %s68
    %s69 = sphi 0, %s66
    %s70 = sphi 0, %s69
    %s86 = sphi 0, %s70
    %s90 = sphi 0, %s90
    %s92 = sphi 0, %s90
    %s93 = sphi 0, %s92
    %s107 = sphi 0, %s93
    %s111 = sphi 0, %s111
    %s113 = sphi 0, %s111
    %s114 = sphi 0, %s113
    %s128 = sphi 0, %s114
    %s136 = sphi 0, %s138
    %s139 = sphi 0, %s136
    %s140 = sphi 0, %s139
    %s156 = sphi 0, %s140
  $region4: #{tpu_custom_call.1} parent=0 // loop_header_branch
    %13 = sbr.rel (%p11) target = $region8
  $region5: #{tpu_custom_call.1} parent=0 // loop_body
    %s15 = ssub.s32 %s10, 1
    %s16 = ssub.s32 %s10, 2
    %s23 = sadd.s32 1, %s18
    %p24 = scmp.ge.s32.totalorder %s23, 4
    %s25 = scalar_select %p24, 0, %s23
    %s26 = sadd.s32 1, %s17
    %s27 = scalar_select %p24, %s26, %s17
    %p28 = scmp.ge.s32.totalorder %s27, 2
    %s29 = scalar_select %p28, 0, %s27
    %s30 = ssub.s32 %s17, %s29
    %s31 = ssub.s32 %s18, %s25
    %s32 = sor.u32 %s30, %s31
    %p33 = scmp.eq.s32.totalorder %s32, 0
    %s35 = sadd.s32 %s34, 1
    %s36 = scalar_select %p33, %s34, %s35
    %p39 = pneg %p33
    %p40 = scmp.eq.s32.totalorder %s10, 7
    %p41 = por %p39, %p40
    %p42 = scmp.ne.s32.totalorder %s34, %s37
    %p43 = scmp.eq.s32.totalorder %s10, 0
    %p44 = por %p42, %p43
    %p45 = scmp.ne.s32.totalorder %s34, %s37
    %p46 = scmp.eq.s32.totalorder %s15, 7
    %p47 = por %p45, %p46
    %p48 = scmp.ne.s32.totalorder %s37, %s38
    %p49 = scmp.eq.s32.totalorder %s15, 0
    %p50 = por %p48, %p49
    %p51 = scmp.ne.s32.totalorder %s37, %s38
    %p52 = scmp.eq.s32.totalorder %s16, 7
    %p53 = por %p51, %p52
    %p55 = scmp.ne.s32.totalorder %s38, %s54
    %p56 = scmp.eq.s32.totalorder %s16, 0
    %p57 = por %p55, %p56
    %s58 = sadd.s32 %s18, 1
    %s59 = smul.u32 %s58, 2
    %s60 = sadd.s32 %s25, 1
    %s61 = smul.u32 %s60, 2
    %s62 = ssub.s32 %s17, %s29
    %s63 = ssub.s32 %s59, %s61
    %s64 = sor.u32 %s62, %s63
    %p65 = scmp.eq.s32.totalorder %s64, 0
    %s67 = sadd.s32 %s66, 1
    %s68 = scalar_select %p65, %s66, %s67
    %p71 = pneg %p65
    %p72 = scmp.eq.s32.totalorder %s10, 7
    %p73 = por %p71, %p72
    %p74 = scmp.ne.s32.totalorder %s66, %s69
    %p75 = scmp.eq.s32.totalorder %s10, 0
    %p76 = por %p74, %p75
    %p77 = scmp.ne.s32.totalorder %s66, %s69
    %p78 = scmp.eq.s32.totalorder %s15, 7
    %p79 = por %p77, %p78
    %p80 = scmp.ne.s32.totalorder %s69, %s70
    %p81 = scmp.eq.s32.totalorder %s15, 0
    %p82 = por %p80, %p81
    %p83 = scmp.ne.s32.totalorder %s69, %s70
    %p84 = scmp.eq.s32.totalorder %s16, 7
    %p85 = por %p83, %p84
    %p87 = scmp.ne.s32.totalorder %s70, %s86
    %p88 = scmp.eq.s32.totalorder %s16, 0
    %p89 = por %p87, %p88
    %s91 = sadd.s32 %s90, 1
    %p94 = scmp.eq.s32.totalorder %s10, 7
    %p95 = scmp.ne.s32.totalorder %s90, %s92
    %p96 = scmp.eq.s32.totalorder %s10, 0
    %p97 = por %p95, %p96
    %p98 = scmp.ne.s32.totalorder %s90, %s92
    %p99 = scmp.eq.s32.totalorder %s15, 7
    %p100 = por %p98, %p99
    %p101 = scmp.ne.s32.totalorder %s92, %s93
    %p102 = scmp.eq.s32.totalorder %s15, 0
    %p103 = por %p101, %p102
    %p104 = scmp.ne.s32.totalorder %s92, %s93
    %p105 = scmp.eq.s32.totalorder %s16, 7
    %p106 = por %p104, %p105
    %p108 = scmp.ne.s32.totalorder %s93, %s107
    %p109 = scmp.eq.s32.totalorder %s16, 0
    %p110 = por %p108, %p109
    %s112 = sadd.s32 %s111, 1
    %p115 = scmp.eq.s32.totalorder %s10, 7
    %p116 = scmp.ne.s32.totalorder %s111, %s113
    %p117 = scmp.eq.s32.totalorder %s10, 0
    %p118 = por %p116, %p117
    %p119 = scmp.ne.s32.totalorder %s111, %s113
    %p120 = scmp.eq.s32.totalorder %s15, 7
    %p121 = por %p119, %p120
    %p122 = scmp.ne.s32.totalorder %s113, %s114
    %p123 = scmp.eq.s32.totalorder %s15, 0
    %p124 = por %p122, %p123
    %p125 = scmp.ne.s32.totalorder %s113, %s114
    %p126 = scmp.eq.s32.totalorder %s16, 7
    %p127 = por %p125, %p126
    %p129 = scmp.ne.s32.totalorder %s114, %s128
    %p130 = scmp.eq.s32.totalorder %s16, 0
    %p131 = por %p129, %p130
    %s132 = ssub.s32 %s17, %s29
    %s133 = ssub.s32 %s18, %s25
    %s134 = sor.u32 %s132, %s133
    %p135 = scmp.eq.s32.totalorder %s134, 0
    %s137 = sadd.s32 %s136, 1
    %s138 = scalar_select %p135, %s136, %s137
    %p141 = pneg %p135
    %p142 = scmp.eq.s32.totalorder %s10, 7
    %p143 = por %p141, %p142
    %p144 = scmp.ne.s32.totalorder %s136, %s139
    %p145 = scmp.eq.s32.totalorder %s10, 0
    %p146 = por %p144, %p145
    %p147 = scmp.ne.s32.totalorder %s136, %s139
    %p148 = scmp.eq.s32.totalorder %s15, 7
    %p149 = por %p147, %p148
    %p150 = scmp.ne.s32.totalorder %s139, %s140
    %p151 = scmp.eq.s32.totalorder %s15, 0
    %p152 = por %p150, %p151
    %p153 = scmp.ne.s32.totalorder %s139, %s140
    %p154 = scmp.eq.s32.totalorder %s16, 7
    %p155 = por %p153, %p154
    %p157 = scmp.ne.s32.totalorder %s140, %s156
    %p158 = scmp.eq.s32.totalorder %s16, 0
    %p159 = por %p157, %p158
    %p160 = scmp.le.s32.totalorder 1, %s10
    %p161 = scmp.lt.s32.totalorder %s10, 9
    %p162 = pnand %p160, %p161
    %p163 = pneg %p162
    // Predicated region
    $region9: #{tpu_custom_call.1} parent=5 // pred_check
      _
    $region10: #{tpu_custom_call.1} parent=5 // pred_check_branch
      %165 = sbr.rel (%p162) target = $region12
    $region11: #{tpu_custom_call.1} parent=5 // pred_region
      %s166 = ssub.s32 %s10, 1
      // Predicated region
      $region13: #{tpu_custom_call.1} parent=11 // pred_check
        %p167 = pneg %p103
      $region14: #{tpu_custom_call.1} parent=11 // pred_check_branch
        %169 = sbr.rel (%p167) target = $region16
      $region15: #{tpu_custom_call.1} parent=11 // pred_region
        _
      $region16: #{tpu_custom_call.1} parent=11 // pred_fallthru
        _
      // Predicated region
      $region17: #{tpu_custom_call.1} parent=11 // pred_check
        %p170 = pneg %p124
      $region18: #{tpu_custom_call.1} parent=11 // pred_check_branch
        %172 = sbr.rel (%p170) target = $region20
      $region19: #{tpu_custom_call.1} parent=11 // pred_region
        _
      $region20: #{tpu_custom_call.1} parent=11 // pred_fallthru
        _
    $region12: #{tpu_custom_call.1} parent=5 // pred_fallthru
      _
    %p173 = scmp.lt.s32.totalorder %s10, 8
    // Predicated region
    $region21: #{tpu_custom_call.1} parent=5 // pred_check
      %p174 = pneg %p173
    $region22: #{tpu_custom_call.1} parent=5 // pred_check_branch
      %176 = sbr.rel (%p174) target = $region24
    $region23: #{tpu_custom_call.1} parent=5 // pred_region
      // Predicated region
      $region25: #{tpu_custom_call.1} parent=23 // pred_check
        %p177 = pneg %p44
      $region26: #{tpu_custom_call.1} parent=23 // pred_check_branch
        %179 = sbr.rel (%p177) target = $region28
      $region27: #{tpu_custom_call.1} parent=23 // pred_region
        %s180 = smul.u32 4, %s18
        %s181 = ssub.s32 18, %s180
        %p182 = scmp.lt.s32.totalorder %s181, 4
        %s183 = scalar_select %p182, %s181, 4
        %s184 = smul.u32 8, %s183
        %s185 = smul.u32 %s184, 3
        %p186 = scmp.lt.s32.totalorder %s17, 1
        %s187 = scalar_select %p186, %s17, 1
        %p188 = scmp.lt.s32.totalorder %s180, 17
        %s189 = scalar_select %p188, %s180, 17
        %s190 = smul.addr %s189, 3
        %s191 = smul.addr %s187, 54
        %s192 = sadd.s32 %s190, %s191
        %s193 = smul.addr %s192, 8
        %s194 = scalar_lea.vmem %s0, %s193
        %s195 = smul.u32 4, %s18
        %s196 = ssub.s32 18, %s195
        %p197 = scmp.lt.s32.totalorder %s196, 4
        %s198 = scalar_select %p197, %s196, 4
        %s199 = smul.u32 8, %s198
        %s200 = smul.u32 %s199, 3
      $region28: #{tpu_custom_call.1} parent=23 // pred_fallthru
        _
      // Predicated region
      $region29: #{tpu_custom_call.1} parent=23 // pred_check
        %p201 = pneg %p76
      $region30: #{tpu_custom_call.1} parent=23 // pred_check_branch
        %203 = sbr.rel (%p201) target = $region32
      $region31: #{tpu_custom_call.1} parent=23 // pred_region
        %s204 = sadd.s32 %s18, 1
        %s205 = smul.u32 %s204, 2
        %s206 = smul.u32 2, %s205
        %p207 = scmp.lt.s32.totalorder %s17, 1
        %s208 = scalar_select %p207, %s17, 1
        %p209 = scmp.lt.s32.totalorder %s206, 17
        %s210 = scalar_select %p209, %s206, 17
        %s211 = smul.addr %s210, 3
        %s212 = smul.addr %s208, 54
        %s213 = sadd.s32 %s211, %s212
        %s214 = smul.addr %s213, 8
        %s215 = scalar_lea.vmem %s1, %s214
        %s216 = sadd.s32 %s18, 1
        %s217 = smul.u32 %s216, 2
        %s218 = smul.u32 2, %s217
      $region32: #{tpu_custom_call.1} parent=23 // pred_fallthru
        _
    $region24: #{tpu_custom_call.1} parent=5 // pred_fallthru
      _
    %p219 = scmp.le.s32.totalorder 1, %s10
    %p220 = scmp.lt.s32.totalorder %s10, 9
    %p221 = pnand %p219, %p220
    %p222 = pneg %p221
    // Predicated region
    $region33: #{tpu_custom_call.1} parent=5 // pred_check
      _
    $region34: #{tpu_custom_call.1} parent=5 // pred_check_branch
      %224 = sbr.rel (%p221) target = $region36
    $region35: #{tpu_custom_call.1} parent=5 // pred_region
      %s225 = ssub.s32 %s10, 1
      %s226 = smul.u32 4, %s20
      %s227 = ssub.s32 18, %s226
      %p228 = scmp.lt.s32.totalorder %s227, 4
      %s229 = scalar_select %p228, %s227, 4
      %s230 = smul.u32 8, %s229
      %s231 = smul.u32 %s230, 3
      %p232 = scmp.lt.s32.totalorder %s19, 1
      %s233 = scalar_select %p232, %s19, 1
      %p234 = scmp.lt.s32.totalorder %s226, 17
      %s235 = scalar_select %p234, %s226, 17
      %s236 = smul.addr %s235, 3
      %s237 = smul.addr %s233, 54
      %s238 = sadd.s32 %s236, %s237
      %s239 = smul.addr %s238, 8
      %s240 = scalar_lea.vmem %s0, %s239
      %p241 = pneg %p50
      %p242 = pneg %p47
      %s243 = sadd.s32 %s20, 1
      %s244 = smul.u32 %s243, 2
      %s245 = smul.u32 2, %s244
      %p246 = scmp.lt.s32.totalorder %s19, 1
      %s247 = scalar_select %p246, %s19, 1
      %p248 = scmp.lt.s32.totalorder %s245, 17
      %s249 = scalar_select %p248, %s245, 17
      %s250 = smul.addr %s249, 3
      %s251 = smul.addr %s247, 54
      %s252 = sadd.s32 %s250, %s251
      %s253 = smul.addr %s252, 8
      %s254 = scalar_lea.vmem %s1, %s253
      %p255 = pneg %p82
      %p256 = pneg %p79
      %p257 = pneg %p103
      %p258 = pneg %p100
      %p259 = pneg %p124
      %p260 = pneg %p121
      %p261 = pneg %p152
      %p262 = pneg %p149
      %s263 = smul.u32 4, %s20
      %p264 = scmp.lt.s32.totalorder %s19, 1
      %s265 = scalar_select %p264, %s19, 1
      %p266 = scmp.lt.s32.totalorder %s263, 15
      %s267 = scalar_select %p266, %s263, 15
      %s268 = smul.addr %s267, 4
      %s269 = smul.addr %s265, 64
      %s270 = sadd.s32 %s268, %s269
      %s271 = smul.addr %s270, 8
      %s272 = scalar_lea.vmem %s4, %s271
      %s273 = smul.u32 4, %s20
      %s274 = ssub.s32 18, %s273
      %p275 = scmp.lt.s32.totalorder %s274, 4
      %s276 = scalar_select %p275, %s274, 4
      %s277 = smul.u32 8, %s276
      %s278 = smul.u32 %s277, 3
      %p279 = scmp.lt.s32.totalorder %s19, 1
      %s280 = scalar_select %p279, %s19, 1
      %p281 = scmp.lt.s32.totalorder %s273, 17
      %s282 = scalar_select %p281, %s273, 17
      %s283 = smul.addr %s282, 3
      %s284 = smul.addr %s280, 54
      %s285 = sadd.s32 %s283, %s284
      %s286 = smul.addr %s285, 8
      %s287 = scalar_lea.vmem %s0, %s286
      %s288 = smul.u32 4, %s20
      %s289 = ssub.s32 18, %s288
      %p290 = scmp.lt.s32.totalorder %s289, 4
      %s291 = scalar_select %p290, %s289, 4
      %s292 = smul.u32 8, %s291
      %s293 = smul.u32 %s292, 3
      %s294 = sadd.s32 %s20, 1
      %s295 = smul.u32 %s294, 2
      %s296 = smul.u32 2, %s295
      %p297 = scmp.lt.s32.totalorder %s19, 1
      %s298 = scalar_select %p297, %s19, 1
      %p299 = scmp.lt.s32.totalorder %s296, 17
      %s300 = scalar_select %p299, %s296, 17
      %s301 = smul.addr %s300, 3
      %s302 = smul.addr %s298, 54
      %s303 = sadd.s32 %s301, %s302
      %s304 = smul.addr %s303, 8
      %s305 = scalar_lea.vmem %s1, %s304
      %s306 = sadd.s32 %s20, 1
      %s307 = smul.u32 %s306, 2
      %s308 = smul.u32 2, %s307
      %s309 = smul.u32 4, %s20
      %p310 = scmp.lt.s32.totalorder %s19, 1
      %s311 = scalar_select %p310, %s19, 1
      %p312 = scmp.lt.s32.totalorder %s309, 15
      %s313 = scalar_select %p312, %s309, 15
      %s314 = smul.addr %s313, 4
      %s315 = smul.addr %s311, 64
      %s316 = sadd.s32 %s314, %s315
      %s317 = smul.addr %s316, 8
      %s318 = scalar_lea.vmem %s4, %s317
      %s319 = smul.u32 4, %s20
      %v320 = vld [vmem:[%s287] sm:$0xff]
      %v321 = vld [vmem:[%s287 + $0x8] sm:$0xff]
      %v322 = vld [vmem:[%s287 + $0x10] sm:$0x3]
      %v323 = vld [vmem:[%s287 + $0x18] sm:$0xff]
      %v324 = vld [vmem:[%s287 + $0x20] sm:$0xff]
      %v325 = vld [vmem:[%s287 + $0x28] sm:$0x3]
      %v326 = vld [vmem:[%s287 + $0x30] sm:$0xff]
      %v327 = vld [vmem:[%s287 + $0x38] sm:$0xff]
      %v328 = vld [vmem:[%s287 + $0x40] sm:$0x3]
      %v329 = vld [vmem:[%s287 + $0x48] sm:$0xff]
      %v330 = vld [vmem:[%s287 + $0x50] sm:$0xff]
      %v331 = vld [vmem:[%s287 + $0x58] sm:$0x3]
      %vm332 = vcmask 31744
      %333 = vst.msk [vmem:[#allocation2] sm:$0xff] %vm332, %v320
      %334 = vst.msk [vmem:[#allocation2 + $0x8] sm:$0xff] %vm332, %v321
      %vm335 = vcmask 25600
      %336 = vst.msk [vmem:[#allocation2 + $0x10] sm:$0x3] %vm335, %v322
      %337 = vst.msk [vmem:[#allocation2 + $0x18] sm:$0xff] %vm332, %v323
      %338 = vst.msk [vmem:[#allocation2 + $0x20] sm:$0xff] %vm332, %v324
      %339 = vst.msk [vmem:[#allocation2 + $0x28] sm:$0x3] %vm335, %v325
      %340 = vst.msk [vmem:[#allocation2 + $0x30] sm:$0xff] %vm332, %v326
      %341 = vst.msk [vmem:[#allocation2 + $0x38] sm:$0xff] %vm332, %v327
      %342 = vst.msk [vmem:[#allocation2 + $0x40] sm:$0x3] %vm335, %v328
      %343 = vst.msk [vmem:[#allocation2 + $0x48] sm:$0xff] %vm332, %v329
      %344 = vst.msk [vmem:[#allocation2 + $0x50] sm:$0xff] %vm332, %v330
      %345 = vst.msk [vmem:[#allocation2 + $0x58] sm:$0x3] %vm335, %v331
      %v346 = vld [vmem:[%s305] sm:$0xff]
      %v347 = vld [vmem:[%s305 + $0x8] sm:$0xff]
      %v348 = vld [vmem:[%s305 + $0x10] sm:$0x3]
      %v349 = vld [vmem:[%s305 + $0x18] sm:$0xff]
      %v350 = vld [vmem:[%s305 + $0x20] sm:$0xff]
      %v351 = vld [vmem:[%s305 + $0x28] sm:$0x3]
      %s352 = scalar_lea.vmem [#allocation2], 96
      %353 = vst.msk [vmem:[%s352] sm:$0xff] %vm332, %v346
      %354 = vst.msk [vmem:[%s352 + $0x8] sm:$0xff] %vm332, %v347
      %355 = vst.msk [vmem:[%s352 + $0x10] sm:$0x3] %vm335, %v348
      %356 = vst.msk [vmem:[%s352 + $0x18] sm:$0xff] %vm332, %v349
      %357 = vst.msk [vmem:[%s352 + $0x20] sm:$0xff] %vm332, %v350
      %358 = vst.msk [vmem:[%s352 + $0x28] sm:$0x3] %vm335, %v351
      %v359 = vld [vmem:[%s3] sm:$0x1]
      %v360 = vld [vmem:[#allocation2] sm:$0xff]
      %v361 = vld [vmem:[#allocation2 + $0x8] sm:$0xff]
      %v362 = vld [vmem:[#allocation2 + $0x10] sm:$0x3]
      %v363 = vld [vmem:[#allocation2 + $0x18] sm:$0xff]
      %v364 = vld [vmem:[#allocation2 + $0x20] sm:$0xff]
      %v365 = vld [vmem:[#allocation2 + $0x28] sm:$0x3]
      %v366 = vld [vmem:[#allocation2 + $0x30] sm:$0xff]
      %v367 = vld [vmem:[#allocation2 + $0x38] sm:$0xff]
      %v368 = vld [vmem:[#allocation2 + $0x40] sm:$0x3]
      %v369 = vld [vmem:[#allocation2 + $0x48] sm:$0xff]
      %v370 = vld [vmem:[#allocation2 + $0x50] sm:$0xff]
      %v371 = vld [vmem:[#allocation2 + $0x58] sm:$0x3]
      %v372 = vld [vmem:[%s2] sm:$0xf]
      %vm385 = vcmask 1046528
      %v386 = vrot.slane %v360, 1
      %v387 = vrot.slane %v361, 1
      %v388 = vsel %vm385, %v386, %v387
      %v389 = vrot.slane %v362, 1
      %v390 = vsel %vm385, %v387, %v389
      %v391 = vrot.slane %v363, 1
      %v392 = vrot.slane %v364, 1
      %v393 = vsel %vm385, %v391, %v392
      %v394 = vrot.slane %v365, 1
      %v395 = vsel %vm385, %v392, %v394
      %v396 = vrot.slane %v366, 1
      %v397 = vrot.slane %v367, 1
      %v398 = vsel %vm385, %v396, %v397
      %v399 = vrot.slane %v368, 1
      %v400 = vsel %vm385, %v397, %v399
      %v401 = vrot.slane %v369, 1
      %v402 = vrot.slane %v370, 1
      %v403 = vsel %vm385, %v401, %v402
      %v404 = vrot.slane %v371, 1
      %v405 = vsel %vm385, %v402, %v404
      %407 = vrot.lane.b32.xlu0 %v372, 124
      %v408 = vpop.permute.xlu0 %407
      %v409 = vsel %vm332, %v388, 0
      %v411 = vsel %vm332, %v390, 0
      %v413 = vsel %vm332, %v393, 0
      %v415 = vsel %vm332, %v395, 0
      %v417 = vsel %vm332, %v398, 0
      %v419 = vsel %vm332, %v400, 0
      %v421 = vsel %vm332, %v403, 0
      %v423 = vsel %vm332, %v405, 0
      %vm425 = vcmask 1043456
      %v426 = vsel %vm425, %v408, 0
      %428 = vmatpush.msra.mxu0 0.0
      %429 = vmatpush.msra.mxu0 0.0
      %430 = vmatpush.msra.mxu0 0.0
      %431 = vmatpush.msra.mxu0 0.0
      %432 = vmatpush.msra.mxu0 0.0
      %433 = vmatpush.msra.mxu0 0.0
      %434 = vmatpush.msra.mxu0 0.0
      %435 = vmatpush.msra.mxu0 0.0
      %436 = vmatpush.msra.mxu0 0.0
      %437 = vmatpush.msra.mxu0 0.0
      %438 = vmatpush.msra.mxu0 0.0
      %439 = vmatpush.msra.mxu0 0.0
      %440 = vmatpush.msra.mxu0 0.0
      %441 = vmatpush.msra.mxu0 0.0
      %442 = vmatpush.msra.mxu0 0.0
      %443 = vmatpush.msra.mxu0 %v426
      %444 = vmatmul.f32.gmra.mxu0 %v409
      %v445 = vpop.f32.mrf.mxu0
      %v446 = vadd.f32 0.0, %v445
      %447 = vmatmul.f32.gmra.mxu0 %v411
      %v448 = vpop.f32.mrf.mxu0
      %v449 = vadd.f32 0.0, %v448
      %450 = vmatmul.f32.gmra.mxu0 %v413
      %v451 = vpop.f32.mrf.mxu0
      %v452 = vadd.f32 0.0, %v451
      %453 = vmatmul.f32.gmra.mxu0 %v415
      %v454 = vpop.f32.mrf.mxu0
      %v455 = vadd.f32 0.0, %v454
      %456 = vmatmul.f32.gmra.mxu0 %v417
      %v457 = vpop.f32.mrf.mxu0
      %v458 = vadd.f32 0.0, %v457
      %459 = vmatmul.f32.gmra.mxu0 %v419
      %v460 = vpop.f32.mrf.mxu0
      %v461 = vadd.f32 0.0, %v460
      %462 = vmatmul.f32.gmra.mxu0 %v421
      %v463 = vpop.f32.mrf.mxu0
      %v464 = vadd.f32 0.0, %v463
      %465 = vmatmul.f32.gmra.mxu0 %v423
      %v466 = vpop.f32.mrf.mxu0
      %v467 = vadd.f32 0.0, %v466
      %468 = vdwg.mxu0
      %v469 = vsel %vm332, %v360, 0
      %v471 = vsel %vm332, %v361, 0
      %v473 = vsel %vm332, %v363, 0
      %v475 = vsel %vm332, %v364, 0
      %v477 = vsel %vm332, %v366, 0
      %v479 = vsel %vm332, %v367, 0
      %v481 = vsel %vm332, %v369, 0
      %v483 = vsel %vm332, %v370, 0
      %v485 = vsel %vm425, %v372, 0
      %487 = vmatpush.msra.mxu0 0.0
      %488 = vmatpush.msra.mxu0 0.0
      %489 = vmatpush.msra.mxu0 0.0
      %490 = vmatpush.msra.mxu0 0.0
      %491 = vmatpush.msra.mxu0 0.0
      %492 = vmatpush.msra.mxu0 0.0
      %493 = vmatpush.msra.mxu0 0.0
      %494 = vmatpush.msra.mxu0 0.0
      %495 = vmatpush.msra.mxu0 0.0
      %496 = vmatpush.msra.mxu0 0.0
      %497 = vmatpush.msra.mxu0 0.0
      %498 = vmatpush.msra.mxu0 0.0
      %499 = vmatpush.msra.mxu0 0.0
      %500 = vmatpush.msra.mxu0 0.0
      %501 = vmatpush.msra.mxu0 0.0
      %502 = vmatpush.msra.mxu0 %v485
      %503 = vmatmul.f32.gmra.mxu0 %v469
      %v504 = vpop.f32.mrf.mxu0
      %v505 = vadd.f32 %v446, %v504
      %506 = vmatmul.f32.gmra.mxu0 %v471
      %v507 = vpop.f32.mrf.mxu0
      %v508 = vadd.f32 %v449, %v507
      %509 = vmatmul.f32.gmra.mxu0 %v473
      %v510 = vpop.f32.mrf.mxu0
      %v511 = vadd.f32 %v452, %v510
      %512 = vmatmul.f32.gmra.mxu0 %v475
      %v513 = vpop.f32.mrf.mxu0
      %v514 = vadd.f32 %v455, %v513
      %515 = vmatmul.f32.gmra.mxu0 %v477
      %v516 = vpop.f32.mrf.mxu0
      %v517 = vadd.f32 %v458, %v516
      %518 = vmatmul.f32.gmra.mxu0 %v479
      %v519 = vpop.f32.mrf.mxu0
      %v520 = vadd.f32 %v461, %v519
      %521 = vmatmul.f32.gmra.mxu0 %v481
      %v522 = vpop.f32.mrf.mxu0
      %v523 = vadd.f32 %v464, %v522
      %524 = vmatmul.f32.gmra.mxu0 %v483
      %v525 = vpop.f32.mrf.mxu0
      %v526 = vadd.f32 %v467, %v525
      %527 = vdwg.mxu0
      %vm528 = vcmask 1045504
      %v529 = vrot.slane %v360, 2
      %v530 = vrot.slane %v361, 2
      %v531 = vsel %vm528, %v529, %v530
      %v532 = vrot.slane %v362, 2
      %v533 = vsel %vm528, %v530, %v532
      %v534 = vrot.slane %v363, 2
      %v535 = vrot.slane %v364, 2
      %v536 = vsel %vm528, %v534, %v535
      %v537 = vrot.slane %v365, 2
      %v538 = vsel %vm528, %v535, %v537
      %v539 = vrot.slane %v366, 2
      %v540 = vrot.slane %v367, 2
      %v541 = vsel %vm528, %v539, %v540
      %v542 = vrot.slane %v368, 2
      %v543 = vsel %vm528, %v540, %v542
      %v544 = vrot.slane %v369, 2
      %v545 = vrot.slane %v370, 2
      %v546 = vsel %vm528, %v544, %v545
      %v547 = vrot.slane %v371, 2
      %v548 = vsel %vm528, %v545, %v547
      %549 = vrot.lane.b32.xlu0 %v372, 116
      %v550 = vpop.permute.xlu0 %549
      %v551 = vsel %vm332, %v531, 0
      %v553 = vsel %vm332, %v533, 0
      %v555 = vsel %vm332, %v536, 0
      %v557 = vsel %vm332, %v538, 0
      %v559 = vsel %vm332, %v541, 0
      %v561 = vsel %vm332, %v543, 0
      %v563 = vsel %vm332, %v546, 0
      %v565 = vsel %vm332, %v548, 0
      %v567 = vsel %vm425, %v550, 0
      %569 = vmatpush.msra.mxu0 0.0
      %570 = vmatpush.msra.mxu0 0.0
      %571 = vmatpush.msra.mxu0 0.0
      %572 = vmatpush.msra.mxu0 0.0
      %573 = vmatpush.msra.mxu0 0.0
      %574 = vmatpush.msra.mxu0 0.0
      %575 = vmatpush.msra.mxu0 0.0
      %576 = vmatpush.msra.mxu0 0.0
      %577 = vmatpush.msra.mxu0 0.0
      %578 = vmatpush.msra.mxu0 0.0
      %579 = vmatpush.msra.mxu0 0.0
      %580 = vmatpush.msra.mxu0 0.0
      %581 = vmatpush.msra.mxu0 0.0
      %582 = vmatpush.msra.mxu0 0.0
      %583 = vmatpush.msra.mxu0 0.0
      %584 = vmatpush.msra.mxu0 %v567
      %585 = vmatmul.f32.gmra.mxu0 %v551
      %v586 = vpop.f32.mrf.mxu0
      %v587 = vadd.f32 0.0, %v586
      %588 = vmatmul.f32.gmra.mxu0 %v553
      %v589 = vpop.f32.mrf.mxu0
      %v590 = vadd.f32 0.0, %v589
      %591 = vmatmul.f32.gmra.mxu0 %v555
      %v592 = vpop.f32.mrf.mxu0
      %v593 = vadd.f32 0.0, %v592
      %594 = vmatmul.f32.gmra.mxu0 %v557
      %v595 = vpop.f32.mrf.mxu0
      %v596 = vadd.f32 0.0, %v595
      %597 = vmatmul.f32.gmra.mxu0 %v559
      %v598 = vpop.f32.mrf.mxu0
      %v599 = vadd.f32 0.0, %v598
      %600 = vmatmul.f32.gmra.mxu0 %v561
      %v601 = vpop.f32.mrf.mxu0
      %v602 = vadd.f32 0.0, %v601
      %603 = vmatmul.f32.gmra.mxu0 %v563
      %v604 = vpop.f32.mrf.mxu0
      %v605 = vadd.f32 0.0, %v604
      %606 = vmatmul.f32.gmra.mxu0 %v565
      %v607 = vpop.f32.mrf.mxu0
      %v608 = vadd.f32 0.0, %v607
      %609 = vdwg.mxu0
      %618 = vrot.lane.b32.xlu0 %v587, 4
      %v619 = vpop.permute.xlu0 %618
      %620 = vrot.lane.b32.xlu0 %v590, 4
      %v621 = vpop.permute.xlu0 %620
      %622 = vrot.lane.b32.xlu0 %v593, 4
      %v623 = vpop.permute.xlu0 %622
      %624 = vrot.lane.b32.xlu0 %v596, 4
      %v625 = vpop.permute.xlu0 %624
      %626 = vrot.lane.b32.xlu0 %v599, 4
      %v627 = vpop.permute.xlu0 %626
      %628 = vrot.lane.b32.xlu0 %v602, 4
      %v629 = vpop.permute.xlu0 %628
      %630 = vrot.lane.b32.xlu0 %v605, 4
      %v631 = vpop.permute.xlu0 %630
      %632 = vrot.lane.b32.xlu0 %v608, 4
      %v633 = vpop.permute.xlu0 %632
      %v642 = vadd.f32 %v446, %v619
      %v643 = vadd.f32 %v449, %v621
      %v644 = vadd.f32 %v452, %v623
      %v645 = vadd.f32 %v455, %v625
      %v646 = vadd.f32 %v458, %v627
      %v647 = vadd.f32 %v461, %v629
      %v648 = vadd.f32 %v464, %v631
      %v649 = vadd.f32 %v467, %v633
      %s650 = scalar_lea.vmem [#allocation2], 24
      %v651 = vld [vmem:[%s650] sm:$0xff]
      %v652 = vld [vmem:[%s650 + $0x8] sm:$0xff]
      %v653 = vld [vmem:[%s650 + $0x10] sm:$0x3]
      %v654 = vld [vmem:[%s650 + $0x18] sm:$0xff]
      %v655 = vld [vmem:[%s650 + $0x20] sm:$0xff]
      %v656 = vld [vmem:[%s650 + $0x28] sm:$0x3]
      %v657 = vld [vmem:[%s650 + $0x30] sm:$0xff]
      %v658 = vld [vmem:[%s650 + $0x38] sm:$0xff]
      %v659 = vld [vmem:[%s650 + $0x40] sm:$0x3]
      %v660 = vld [vmem:[%s650 + $0x48] sm:$0xff]
      %v661 = vld [vmem:[%s650 + $0x50] sm:$0xff]
      %v662 = vld [vmem:[%s650 + $0x58] sm:$0x3]
      %663 = vrot.lane.b32.xlu0 %v372, 112
      %v664 = vpop.permute.xlu0 %663
      %v666 = vsel %vm332, %v651, 0
      %v669 = vsel %vm332, %v652, 0
      %v672 = vsel %vm332, %v654, 0
      %v675 = vsel %vm332, %v655, 0
      %v678 = vsel %vm332, %v657, 0
      %v681 = vsel %vm332, %v658, 0
      %v684 = vsel %vm332, %v660, 0
      %v687 = vsel %vm332, %v661, 0
      %v689 = vsel %vm425, %v664, 0
      %691 = vmatpush.msra.mxu0 0.0
      %692 = vmatpush.msra.mxu0 0.0
      %693 = vmatpush.msra.mxu0 0.0
      %694 = vmatpush.msra.mxu0 0.0
      %695 = vmatpush.msra.mxu0 0.0
      %696 = vmatpush.msra.mxu0 0.0
      %697 = vmatpush.msra.mxu0 0.0
      %698 = vmatpush.msra.mxu0 0.0
      %699 = vmatpush.msra.mxu0 0.0
      %700 = vmatpush.msra.mxu0 0.0
      %701 = vmatpush.msra.mxu0 0.0
      %702 = vmatpush.msra.mxu0 0.0
      %703 = vmatpush.msra.mxu0 0.0
      %704 = vmatpush.msra.mxu0 0.0
      %705 = vmatpush.msra.mxu0 0.0
      %706 = vmatpush.msra.mxu0 %v689
      %707 = vmatmul.f32.gmra.mxu0 %v666
      %v708 = vpop.f32.mrf.mxu0
      %v709 = vadd.f32 0.0, %v708
      %710 = vmatmul.f32.gmra.mxu0 %v669
      %v711 = vpop.f32.mrf.mxu0
      %v712 = vadd.f32 0.0, %v711
      %713 = vmatmul.f32.gmra.mxu0 %v672
      %v714 = vpop.f32.mrf.mxu0
      %v715 = vadd.f32 0.0, %v714
      %716 = vmatmul.f32.gmra.mxu0 %v675
      %v717 = vpop.f32.mrf.mxu0
      %v718 = vadd.f32 0.0, %v717
      %719 = vmatmul.f32.gmra.mxu0 %v678
      %v720 = vpop.f32.mrf.mxu0
      %v721 = vadd.f32 0.0, %v720
      %722 = vmatmul.f32.gmra.mxu0 %v681
      %v723 = vpop.f32.mrf.mxu0
      %v724 = vadd.f32 0.0, %v723
      %725 = vmatmul.f32.gmra.mxu0 %v684
      %v726 = vpop.f32.mrf.mxu0
      %v727 = vadd.f32 0.0, %v726
      %728 = vmatmul.f32.gmra.mxu0 %v687
      %v729 = vpop.f32.mrf.mxu0
      %v730 = vadd.f32 0.0, %v729
      %731 = vdwg.mxu0
      %v732 = vadd.f32 %v505, %v709
      %v733 = vadd.f32 %v508, %v712
      %v734 = vadd.f32 %v511, %v715
      %v735 = vadd.f32 %v514, %v718
      %v736 = vadd.f32 %v517, %v721
      %v737 = vadd.f32 %v520, %v724
      %v738 = vadd.f32 %v523, %v727
      %v739 = vadd.f32 %v526, %v730
      %v744 = vrot.slane %v651, 1
      %v745 = vrot.slane %v652, 1
      %v746 = vsel %vm385, %v744, %v745
      %v747 = vrot.slane %v653, 1
      %v748 = vsel %vm385, %v745, %v747
      %v749 = vrot.slane %v654, 1
      %v750 = vrot.slane %v655, 1
      %v751 = vsel %vm385, %v749, %v750
      %v752 = vrot.slane %v656, 1
      %v753 = vsel %vm385, %v750, %v752
      %v754 = vrot.slane %v657, 1
      %v755 = vrot.slane %v658, 1
      %v756 = vsel %vm385, %v754, %v755
      %v757 = vrot.slane %v659, 1
      %v758 = vsel %vm385, %v755, %v757
      %v759 = vrot.slane %v660, 1
      %v760 = vrot.slane %v661, 1
      %v761 = vsel %vm385, %v759, %v760
      %v762 = vrot.slane %v662, 1
      %v763 = vsel %vm385, %v760, %v762
      %764 = vrot.lane.b32.xlu0 %v372, 104
      %v765 = vpop.permute.xlu0 %764
      %v766 = vsel %vm332, %v746, 0
      %v768 = vsel %vm332, %v748, 0
      %v770 = vsel %vm332, %v751, 0
      %v772 = vsel %vm332, %v753, 0
      %v774 = vsel %vm332, %v756, 0
      %v776 = vsel %vm332, %v758, 0
      %v778 = vsel %vm332, %v761, 0
      %v780 = vsel %vm332, %v763, 0
      %v782 = vsel %vm425, %v765, 0
      %784 = vmatpush.msra.mxu0 0.0
      %785 = vmatpush.msra.mxu0 0.0
      %786 = vmatpush.msra.mxu0 0.0
      %787 = vmatpush.msra.mxu0 0.0
      %788 = vmatpush.msra.mxu0 0.0
      %789 = vmatpush.msra.mxu0 0.0
      %790 = vmatpush.msra.mxu0 0.0
      %791 = vmatpush.msra.mxu0 0.0
      %792 = vmatpush.msra.mxu0 0.0
      %793 = vmatpush.msra.mxu0 0.0
      %794 = vmatpush.msra.mxu0 0.0
      %795 = vmatpush.msra.mxu0 0.0
      %796 = vmatpush.msra.mxu0 0.0
      %797 = vmatpush.msra.mxu0 0.0
      %798 = vmatpush.msra.mxu0 0.0
      %799 = vmatpush.msra.mxu0 %v782
      %800 = vmatmul.f32.gmra.mxu0 %v766
      %v801 = vpop.f32.mrf.mxu0
      %v802 = vadd.f32 0.0, %v801
      %803 = vmatmul.f32.gmra.mxu0 %v768
      %v804 = vpop.f32.mrf.mxu0
      %v805 = vadd.f32 0.0, %v804
      %806 = vmatmul.f32.gmra.mxu0 %v770
      %v807 = vpop.f32.mrf.mxu0
      %v808 = vadd.f32 0.0, %v807
      %809 = vmatmul.f32.gmra.mxu0 %v772
      %v810 = vpop.f32.mrf.mxu0
      %v811 = vadd.f32 0.0, %v810
      %812 = vmatmul.f32.gmra.mxu0 %v774
      %v813 = vpop.f32.mrf.mxu0
      %v814 = vadd.f32 0.0, %v813
      %815 = vmatmul.f32.gmra.mxu0 %v776
      %v816 = vpop.f32.mrf.mxu0
      %v817 = vadd.f32 0.0, %v816
      %818 = vmatmul.f32.gmra.mxu0 %v778
      %v819 = vpop.f32.mrf.mxu0
      %v820 = vadd.f32 0.0, %v819
      %821 = vmatmul.f32.gmra.mxu0 %v780
      %v822 = vpop.f32.mrf.mxu0
      %v823 = vadd.f32 0.0, %v822
      %824 = vdwg.mxu0
      %v825 = vadd.f32 %v732, %v802
      %v826 = vadd.f32 %v733, %v805
      %v827 = vadd.f32 %v734, %v808
      %v828 = vadd.f32 %v735, %v811
      %v829 = vadd.f32 %v736, %v814
      %v830 = vadd.f32 %v737, %v817
      %v831 = vadd.f32 %v738, %v820
      %v832 = vadd.f32 %v739, %v823
      %v833 = vadd.f32 %v642, %v802
      %v834 = vadd.f32 %v643, %v805
      %v835 = vadd.f32 %v644, %v808
      %v836 = vadd.f32 %v645, %v811
      %v837 = vadd.f32 %v646, %v814
      %v838 = vadd.f32 %v647, %v817
      %v839 = vadd.f32 %v648, %v820
      %v840 = vadd.f32 %v649, %v823
      %849 = vrot.lane.b32.xlu0 %v802, 124
      %v850 = vpop.permute.xlu0 %849
      %851 = vrot.lane.b32.xlu0 %v805, 124
      %v852 = vpop.permute.xlu0 %851
      %853 = vrot.lane.b32.xlu0 %v808, 124
      %v854 = vpop.permute.xlu0 %853
      %855 = vrot.lane.b32.xlu0 %v811, 124
      %v856 = vpop.permute.xlu0 %855
      %857 = vrot.lane.b32.xlu0 %v814, 124
      %v858 = vpop.permute.xlu0 %857
      %859 = vrot.lane.b32.xlu0 %v817, 124
      %v860 = vpop.permute.xlu0 %859
      %861 = vrot.lane.b32.xlu0 %v820, 124
      %v862 = vpop.permute.xlu0 %861
      %863 = vrot.lane.b32.xlu0 %v823, 124
      %v864 = vpop.permute.xlu0 %863
      %v873 = vadd.f32 %v709, %v850
      %v874 = vadd.f32 %v712, %v852
      %v875 = vadd.f32 %v715, %v854
      %v876 = vadd.f32 %v718, %v856
      %v877 = vadd.f32 %v721, %v858
      %v878 = vadd.f32 %v724, %v860
      %v879 = vadd.f32 %v727, %v862
      %v880 = vadd.f32 %v730, %v864
      %v881 = vrot.slane %v651, 2
      %v882 = vrot.slane %v652, 2
      %v883 = vsel %vm528, %v881, %v882
      %v884 = vrot.slane %v653, 2
      %v885 = vsel %vm528, %v882, %v884
      %v886 = vrot.slane %v654, 2
      %v887 = vrot.slane %v655, 2
      %v888 = vsel %vm528, %v886, %v887
      %v889 = vrot.slane %v656, 2
      %v890 = vsel %vm528, %v887, %v889
      %v891 = vrot.slane %v657, 2
      %v892 = vrot.slane %v658, 2
      %v893 = vsel %vm528, %v891, %v892
      %v894 = vrot.slane %v659, 2
      %v895 = vsel %vm528, %v892, %v894
      %v896 = vrot.slane %v660, 2
      %v897 = vrot.slane %v661, 2
      %v898 = vsel %vm528, %v896, %v897
      %v899 = vrot.slane %v662, 2
      %v900 = vsel %vm528, %v897, %v899
      %901 = vrot.lane.b32.xlu0 %v372, 88
      %v902 = vpop.permute.xlu0 %901
      %v903 = vsel %vm332, %v883, 0
      %v905 = vsel %vm332, %v885, 0
      %v907 = vsel %vm332, %v888, 0
      %v909 = vsel %vm332, %v890, 0
      %v911 = vsel %vm332, %v893, 0
      %v913 = vsel %vm332, %v895, 0
      %v915 = vsel %vm332, %v898, 0
      %v917 = vsel %vm332, %v900, 0
      %v919 = vsel %vm425, %v902, 0
      %921 = vmatpush.msra.mxu0 0.0
      %922 = vmatpush.msra.mxu0 0.0
      %923 = vmatpush.msra.mxu0 0.0
      %924 = vmatpush.msra.mxu0 0.0
      %925 = vmatpush.msra.mxu0 0.0
      %926 = vmatpush.msra.mxu0 0.0
      %927 = vmatpush.msra.mxu0 0.0
      %928 = vmatpush.msra.mxu0 0.0
      %929 = vmatpush.msra.mxu0 0.0
      %930 = vmatpush.msra.mxu0 0.0
      %931 = vmatpush.msra.mxu0 0.0
      %932 = vmatpush.msra.mxu0 0.0
      %933 = vmatpush.msra.mxu0 0.0
      %934 = vmatpush.msra.mxu0 0.0
      %935 = vmatpush.msra.mxu0 0.0
      %936 = vmatpush.msra.mxu0 %v919
      %937 = vmatmul.f32.gmra.mxu0 %v903
      %v938 = vpop.f32.mrf.mxu0
      %v939 = vadd.f32 0.0, %v938
      %940 = vmatmul.f32.gmra.mxu0 %v905
      %v941 = vpop.f32.mrf.mxu0
      %v942 = vadd.f32 0.0, %v941
      %943 = vmatmul.f32.gmra.mxu0 %v907
      %v944 = vpop.f32.mrf.mxu0
      %v945 = vadd.f32 0.0, %v944
      %946 = vmatmul.f32.gmra.mxu0 %v909
      %v947 = vpop.f32.mrf.mxu0
      %v948 = vadd.f32 0.0, %v947
      %949 = vmatmul.f32.gmra.mxu0 %v911
      %v950 = vpop.f32.mrf.mxu0
      %v951 = vadd.f32 0.0, %v950
      %952 = vmatmul.f32.gmra.mxu0 %v913
      %v953 = vpop.f32.mrf.mxu0
      %v954 = vadd.f32 0.0, %v953
      %955 = vmatmul.f32.gmra.mxu0 %v915
      %v956 = vpop.f32.mrf.mxu0
      %v957 = vadd.f32 0.0, %v956
      %958 = vmatmul.f32.gmra.mxu0 %v917
      %v959 = vpop.f32.mrf.mxu0
      %v960 = vadd.f32 0.0, %v959
      %961 = vdwg.mxu0
      %970 = vrot.lane.b32.xlu0 %v939, 4
      %v971 = vpop.permute.xlu0 %970
      %972 = vrot.lane.b32.xlu0 %v942, 4
      %v973 = vpop.permute.xlu0 %972
      %974 = vrot.lane.b32.xlu0 %v945, 4
      %v975 = vpop.permute.xlu0 %974
      %976 = vrot.lane.b32.xlu0 %v948, 4
      %v977 = vpop.permute.xlu0 %976
      %978 = vrot.lane.b32.xlu0 %v951, 4
      %v979 = vpop.permute.xlu0 %978
      %980 = vrot.lane.b32.xlu0 %v954, 4
      %v981 = vpop.permute.xlu0 %980
      %982 = vrot.lane.b32.xlu0 %v957, 4
      %v983 = vpop.permute.xlu0 %982
      %984 = vrot.lane.b32.xlu0 %v960, 4
      %v985 = vpop.permute.xlu0 %984
      %v994 = vadd.f32 %v833, %v971
      %v995 = vadd.f32 %v834, %v973
      %v996 = vadd.f32 %v835, %v975
      %v997 = vadd.f32 %v836, %v977
      %v998 = vadd.f32 %v837, %v979
      %v999 = vadd.f32 %v838, %v981
      %v1000 = vadd.f32 %v839, %v983
      %v1001 = vadd.f32 %v840, %v985
      %1002 = vrot.lane.b32.xlu0 %v939, 8
      %v1003 = vpop.permute.xlu0 %1002
      %1004 = vrot.lane.b32.xlu0 %v942, 8
      %v1005 = vpop.permute.xlu0 %1004
      %1006 = vrot.lane.b32.xlu0 %v945, 8
      %v1007 = vpop.permute.xlu0 %1006
      %1008 = vrot.lane.b32.xlu0 %v948, 8
      %v1009 = vpop.permute.xlu0 %1008
      %1010 = vrot.lane.b32.xlu0 %v951, 8
      %v1011 = vpop.permute.xlu0 %1010
      %1012 = vrot.lane.b32.xlu0 %v954, 8
      %v1013 = vpop.permute.xlu0 %1012
      %1014 = vrot.lane.b32.xlu0 %v957, 8
      %v1015 = vpop.permute.xlu0 %1014
      %1016 = vrot.lane.b32.xlu0 %v960, 8
      %v1017 = vpop.permute.xlu0 %1016
      %v1026 = vadd.f32 %v802, %v1003
      %v1027 = vadd.f32 %v805, %v1005
      %v1028 = vadd.f32 %v808, %v1007
      %v1029 = vadd.f32 %v811, %v1009
      %v1030 = vadd.f32 %v814, %v1011
      %v1031 = vadd.f32 %v817, %v1013
      %v1032 = vadd.f32 %v820, %v1015
      %v1033 = vadd.f32 %v823, %v1017
      %s1034 = scalar_lea.vmem [#allocation2], 48
      %v1035 = vld [vmem:[%s1034] sm:$0xff]
      %v1036 = vld [vmem:[%s1034 + $0x8] sm:$0xff]
      %v1037 = vld [vmem:[%s1034 + $0x10] sm:$0x3]
      %v1038 = vld [vmem:[%s1034 + $0x18] sm:$0xff]
      %v1039 = vld [vmem:[%s1034 + $0x20] sm:$0xff]
      %v1040 = vld [vmem:[%s1034 + $0x28] sm:$0x3]
      %v1041 = vld [vmem:[%s1034 + $0x30] sm:$0xff]
      %v1042 = vld [vmem:[%s1034 + $0x38] sm:$0xff]
      %v1043 = vld [vmem:[%s1034 + $0x40] sm:$0x3]
      %v1044 = vld [vmem:[%s1034 + $0x48] sm:$0xff]
      %v1045 = vld [vmem:[%s1034 + $0x50] sm:$0xff]
      %v1046 = vld [vmem:[%s1034 + $0x58] sm:$0x3]
      %1047 = vrot.lane.b32.xlu0 %v372, 80
      %v1048 = vpop.permute.xlu0 %1047
      %v1050 = vsel %vm332, %v1035, 0
      %v1053 = vsel %vm332, %v1036, 0
      %v1056 = vsel %vm332, %v1038, 0
      %v1059 = vsel %vm332, %v1039, 0
      %v1062 = vsel %vm332, %v1041, 0
      %v1065 = vsel %vm332, %v1042, 0
      %v1068 = vsel %vm332, %v1044, 0
      %v1071 = vsel %vm332, %v1045, 0
      %v1073 = vsel %vm425, %v1048, 0
      %1075 = vmatpush.msra.mxu0 0.0
      %1076 = vmatpush.msra.mxu0 0.0
      %1077 = vmatpush.msra.mxu0 0.0
      %1078 = vmatpush.msra.mxu0 0.0
      %1079 = vmatpush.msra.mxu0 0.0
      %1080 = vmatpush.msra.mxu0 0.0
      %1081 = vmatpush.msra.mxu0 0.0
      %1082 = vmatpush.msra.mxu0 0.0
      %1083 = vmatpush.msra.mxu0 0.0
      %1084 = vmatpush.msra.mxu0 0.0
      %1085 = vmatpush.msra.mxu0 0.0
      %1086 = vmatpush.msra.mxu0 0.0
      %1087 = vmatpush.msra.mxu0 0.0
      %1088 = vmatpush.msra.mxu0 0.0
      %1089 = vmatpush.msra.mxu0 0.0
      %1090 = vmatpush.msra.mxu0 %v1073
      %1091 = vmatmul.f32.gmra.mxu0 %v1050
      %v1092 = vpop.f32.mrf.mxu0
      %v1093 = vadd.f32 0.0, %v1092
      %1094 = vmatmul.f32.gmra.mxu0 %v1053
      %v1095 = vpop.f32.mrf.mxu0
      %v1096 = vadd.f32 0.0, %v1095
      %1097 = vmatmul.f32.gmra.mxu0 %v1056
      %v1098 = vpop.f32.mrf.mxu0
      %v1099 = vadd.f32 0.0, %v1098
      %1100 = vmatmul.f32.gmra.mxu0 %v1059
      %v1101 = vpop.f32.mrf.mxu0
      %v1102 = vadd.f32 0.0, %v1101
      %1103 = vmatmul.f32.gmra.mxu0 %v1062
      %v1104 = vpop.f32.mrf.mxu0
      %v1105 = vadd.f32 0.0, %v1104
      %1106 = vmatmul.f32.gmra.mxu0 %v1065
      %v1107 = vpop.f32.mrf.mxu0
      %v1108 = vadd.f32 0.0, %v1107
      %1109 = vmatmul.f32.gmra.mxu0 %v1068
      %v1110 = vpop.f32.mrf.mxu0
      %v1111 = vadd.f32 0.0, %v1110
      %1112 = vmatmul.f32.gmra.mxu0 %v1071
      %v1113 = vpop.f32.mrf.mxu0
      %v1114 = vadd.f32 0.0, %v1113
      %1115 = vdwg.mxu0
      %1124 = vrot.lane.b32.xlu0 %v1093, 4
      %v1125 = vpop.permute.xlu0 %1124
      %1126 = vrot.lane.b32.xlu0 %v1096, 4
      %v1127 = vpop.permute.xlu0 %1126
      %1128 = vrot.lane.b32.xlu0 %v1099, 4
      %v1129 = vpop.permute.xlu0 %1128
      %1130 = vrot.lane.b32.xlu0 %v1102, 4
      %v1131 = vpop.permute.xlu0 %1130
      %1132 = vrot.lane.b32.xlu0 %v1105, 4
      %v1133 = vpop.permute.xlu0 %1132
      %1134 = vrot.lane.b32.xlu0 %v1108, 4
      %v1135 = vpop.permute.xlu0 %1134
      %1136 = vrot.lane.b32.xlu0 %v1111, 4
      %v1137 = vpop.permute.xlu0 %1136
      %1138 = vrot.lane.b32.xlu0 %v1114, 4
      %v1139 = vpop.permute.xlu0 %1138
      %v1148 = vadd.f32 %v873, %v1125
      %v1149 = vadd.f32 %v874, %v1127
      %v1150 = vadd.f32 %v875, %v1129
      %v1151 = vadd.f32 %v876, %v1131
      %v1152 = vadd.f32 %v877, %v1133
      %v1153 = vadd.f32 %v878, %v1135
      %v1154 = vadd.f32 %v879, %v1137
      %v1155 = vadd.f32 %v880, %v1139
      %v1160 = vrot.slane %v1035, 1
      %v1161 = vrot.slane %v1036, 1
      %v1162 = vsel %vm385, %v1160, %v1161
      %v1163 = vrot.slane %v1037, 1
      %v1164 = vsel %vm385, %v1161, %v1163
      %v1165 = vrot.slane %v1038, 1
      %v1166 = vrot.slane %v1039, 1
      %v1167 = vsel %vm385, %v1165, %v1166
      %v1168 = vrot.slane %v1040, 1
      %v1169 = vsel %vm385, %v1166, %v1168
      %v1170 = vrot.slane %v1041, 1
      %v1171 = vrot.slane %v1042, 1
      %v1172 = vsel %vm385, %v1170, %v1171
      %v1173 = vrot.slane %v1043, 1
      %v1174 = vsel %vm385, %v1171, %v1173
      %v1175 = vrot.slane %v1044, 1
      %v1176 = vrot.slane %v1045, 1
      %v1177 = vsel %vm385, %v1175, %v1176
      %v1178 = vrot.slane %v1046, 1
      %v1179 = vsel %vm385, %v1176, %v1178
      %1180 = vrot.lane.b32.xlu0 %v372, 76
      %v1181 = vpop.permute.xlu0 %1180
      %v1182 = vsel %vm332, %v1162, 0
      %v1184 = vsel %vm332, %v1164, 0
      %v1186 = vsel %vm332, %v1167, 0
      %v1188 = vsel %vm332, %v1169, 0
      %v1190 = vsel %vm332, %v1172, 0
      %v1192 = vsel %vm332, %v1174, 0
      %v1194 = vsel %vm332, %v1177, 0
      %v1196 = vsel %vm332, %v1179, 0
      %v1198 = vsel %vm425, %v1181, 0
      %1200 = vmatpush.msra.mxu0 0.0
      %1201 = vmatpush.msra.mxu0 0.0
      %1202 = vmatpush.msra.mxu0 0.0
      %1203 = vmatpush.msra.mxu0 0.0
      %1204 = vmatpush.msra.mxu0 0.0
      %1205 = vmatpush.msra.mxu0 0.0
      %1206 = vmatpush.msra.mxu0 0.0
      %1207 = vmatpush.msra.mxu0 0.0
      %1208 = vmatpush.msra.mxu0 0.0
      %1209 = vmatpush.msra.mxu0 0.0
      %1210 = vmatpush.msra.mxu0 0.0
      %1211 = vmatpush.msra.mxu0 0.0
      %1212 = vmatpush.msra.mxu0 0.0
      %1213 = vmatpush.msra.mxu0 0.0
      %1214 = vmatpush.msra.mxu0 0.0
      %1215 = vmatpush.msra.mxu0 %v1198
      %1216 = vmatmul.f32.gmra.mxu0 %v1182
      %v1217 = vpop.f32.mrf.mxu0
      %v1218 = vadd.f32 0.0, %v1217
      %1219 = vmatmul.f32.gmra.mxu0 %v1184
      %v1220 = vpop.f32.mrf.mxu0
      %v1221 = vadd.f32 0.0, %v1220
      %1222 = vmatmul.f32.gmra.mxu0 %v1186
      %v1223 = vpop.f32.mrf.mxu0
      %v1224 = vadd.f32 0.0, %v1223
      %1225 = vmatmul.f32.gmra.mxu0 %v1188
      %v1226 = vpop.f32.mrf.mxu0
      %v1227 = vadd.f32 0.0, %v1226
      %1228 = vmatmul.f32.gmra.mxu0 %v1190
      %v1229 = vpop.f32.mrf.mxu0
      %v1230 = vadd.f32 0.0, %v1229
      %1231 = vmatmul.f32.gmra.mxu0 %v1192
      %v1232 = vpop.f32.mrf.mxu0
      %v1233 = vadd.f32 0.0, %v1232
      %1234 = vmatmul.f32.gmra.mxu0 %v1194
      %v1235 = vpop.f32.mrf.mxu0
      %v1236 = vadd.f32 0.0, %v1235
      %1237 = vmatmul.f32.gmra.mxu0 %v1196
      %v1238 = vpop.f32.mrf.mxu0
      %v1239 = vadd.f32 0.0, %v1238
      %1240 = vdwg.mxu0
      %1249 = vrot.lane.b32.xlu0 %v1218, 4
      %v1250 = vpop.permute.xlu0 %1249
      %1251 = vrot.lane.b32.xlu0 %v1221, 4
      %v1252 = vpop.permute.xlu0 %1251
      %1253 = vrot.lane.b32.xlu0 %v1224, 4
      %v1254 = vpop.permute.xlu0 %1253
      %1255 = vrot.lane.b32.xlu0 %v1227, 4
      %v1256 = vpop.permute.xlu0 %1255
      %1257 = vrot.lane.b32.xlu0 %v1230, 4
      %v1258 = vpop.permute.xlu0 %1257
      %1259 = vrot.lane.b32.xlu0 %v1233, 4
      %v1260 = vpop.permute.xlu0 %1259
      %1261 = vrot.lane.b32.xlu0 %v1236, 4
      %v1262 = vpop.permute.xlu0 %1261
      %1263 = vrot.lane.b32.xlu0 %v1239, 4
      %v1264 = vpop.permute.xlu0 %1263
      %v1273 = vadd.f32 %v1148, %v1250
      %v1274 = vadd.f32 %v1149, %v1252
      %v1275 = vadd.f32 %v1150, %v1254
      %v1276 = vadd.f32 %v1151, %v1256
      %v1277 = vadd.f32 %v1152, %v1258
      %v1278 = vadd.f32 %v1153, %v1260
      %v1279 = vadd.f32 %v1154, %v1262
      %v1280 = vadd.f32 %v1155, %v1264
      %1281 = vrot.lane.b32.xlu0 %v1218, 8
      %v1282 = vpop.permute.xlu0 %1281
      %1283 = vrot.lane.b32.xlu0 %v1221, 8
      %v1284 = vpop.permute.xlu0 %1283
      %1285 = vrot.lane.b32.xlu0 %v1224, 8
      %v1286 = vpop.permute.xlu0 %1285
      %1287 = vrot.lane.b32.xlu0 %v1227, 8
      %v1288 = vpop.permute.xlu0 %1287
      %1289 = vrot.lane.b32.xlu0 %v1230, 8
      %v1290 = vpop.permute.xlu0 %1289
      %1291 = vrot.lane.b32.xlu0 %v1233, 8
      %v1292 = vpop.permute.xlu0 %1291
      %1293 = vrot.lane.b32.xlu0 %v1236, 8
      %v1294 = vpop.permute.xlu0 %1293
      %1295 = vrot.lane.b32.xlu0 %v1239, 8
      %v1296 = vpop.permute.xlu0 %1295
      %v1305 = vadd.f32 %v1026, %v1282
      %v1306 = vadd.f32 %v1027, %v1284
      %v1307 = vadd.f32 %v1028, %v1286
      %v1308 = vadd.f32 %v1029, %v1288
      %v1309 = vadd.f32 %v1030, %v1290
      %v1310 = vadd.f32 %v1031, %v1292
      %v1311 = vadd.f32 %v1032, %v1294
      %v1312 = vadd.f32 %v1033, %v1296
      %v1313 = vrot.slane %v1035, 2
      %v1314 = vrot.slane %v1036, 2
      %v1315 = vsel %vm528, %v1313, %v1314
      %v1316 = vrot.slane %v1037, 2
      %v1317 = vsel %vm528, %v1314, %v1316
      %v1318 = vrot.slane %v1038, 2
      %v1319 = vrot.slane %v1039, 2
      %v1320 = vsel %vm528, %v1318, %v1319
      %v1321 = vrot.slane %v1040, 2
      %v1322 = vsel %vm528, %v1319, %v1321
      %v1323 = vrot.slane %v1041, 2
      %v1324 = vrot.slane %v1042, 2
      %v1325 = vsel %vm528, %v1323, %v1324
      %v1326 = vrot.slane %v1043, 2
      %v1327 = vsel %vm528, %v1324, %v1326
      %v1328 = vrot.slane %v1044, 2
      %v1329 = vrot.slane %v1045, 2
      %v1330 = vsel %vm528, %v1328, %v1329
      %v1331 = vrot.slane %v1046, 2
      %v1332 = vsel %vm528, %v1329, %v1331
      %1333 = vrot.lane.b32.xlu0 %v372, 68
      %v1334 = vpop.permute.xlu0 %1333
      %v1335 = vsel %vm332, %v1315, 0
      %v1337 = vsel %vm332, %v1317, 0
      %v1339 = vsel %vm332, %v1320, 0
      %v1341 = vsel %vm332, %v1322, 0
      %v1343 = vsel %vm332, %v1325, 0
      %v1345 = vsel %vm332, %v1327, 0
      %v1347 = vsel %vm332, %v1330, 0
      %v1349 = vsel %vm332, %v1332, 0
      %v1351 = vsel %vm425, %v1334, 0
      %1353 = vmatpush.msra.mxu0 0.0
      %1354 = vmatpush.msra.mxu0 0.0
      %1355 = vmatpush.msra.mxu0 0.0
      %1356 = vmatpush.msra.mxu0 0.0
      %1357 = vmatpush.msra.mxu0 0.0
      %1358 = vmatpush.msra.mxu0 0.0
      %1359 = vmatpush.msra.mxu0 0.0
      %1360 = vmatpush.msra.mxu0 0.0
      %1361 = vmatpush.msra.mxu0 0.0
      %1362 = vmatpush.msra.mxu0 0.0
      %1363 = vmatpush.msra.mxu0 0.0
      %1364 = vmatpush.msra.mxu0 0.0
      %1365 = vmatpush.msra.mxu0 0.0
      %1366 = vmatpush.msra.mxu0 0.0
      %1367 = vmatpush.msra.mxu0 0.0
      %1368 = vmatpush.msra.mxu0 %v1351
      %1369 = vmatmul.f32.gmra.mxu0 %v1335
      %v1370 = vpop.f32.mrf.mxu0
      %v1371 = vadd.f32 0.0, %v1370
      %1372 = vmatmul.f32.gmra.mxu0 %v1337
      %v1373 = vpop.f32.mrf.mxu0
      %v1374 = vadd.f32 0.0, %v1373
      %1375 = vmatmul.f32.gmra.mxu0 %v1339
      %v1376 = vpop.f32.mrf.mxu0
      %v1377 = vadd.f32 0.0, %v1376
      %1378 = vmatmul.f32.gmra.mxu0 %v1341
      %v1379 = vpop.f32.mrf.mxu0
      %v1380 = vadd.f32 0.0, %v1379
      %1381 = vmatmul.f32.gmra.mxu0 %v1343
      %v1382 = vpop.f32.mrf.mxu0
      %v1383 = vadd.f32 0.0, %v1382
      %1384 = vmatmul.f32.gmra.mxu0 %v1345
      %v1385 = vpop.f32.mrf.mxu0
      %v1386 = vadd.f32 0.0, %v1385
      %1387 = vmatmul.f32.gmra.mxu0 %v1347
      %v1388 = vpop.f32.mrf.mxu0
      %v1389 = vadd.f32 0.0, %v1388
      %1390 = vmatmul.f32.gmra.mxu0 %v1349
      %v1391 = vpop.f32.mrf.mxu0
      %v1392 = vadd.f32 0.0, %v1391
      %1393 = vdwg.mxu0
      %1402 = vrot.lane.b32.xlu0 %v1371, 12
      %v1403 = vpop.permute.xlu0 %1402
      %1404 = vrot.lane.b32.xlu0 %v1374, 12
      %v1405 = vpop.permute.xlu0 %1404
      %1406 = vrot.lane.b32.xlu0 %v1377, 12
      %v1407 = vpop.permute.xlu0 %1406
      %1408 = vrot.lane.b32.xlu0 %v1380, 12
      %v1409 = vpop.permute.xlu0 %1408
      %1410 = vrot.lane.b32.xlu0 %v1383, 12
      %v1411 = vpop.permute.xlu0 %1410
      %1412 = vrot.lane.b32.xlu0 %v1386, 12
      %v1413 = vpop.permute.xlu0 %1412
      %1414 = vrot.lane.b32.xlu0 %v1389, 12
      %v1415 = vpop.permute.xlu0 %1414
      %1416 = vrot.lane.b32.xlu0 %v1392, 12
      %v1417 = vpop.permute.xlu0 %1416
      %v1426 = vadd.f32 %v1305, %v1403
      %v1427 = vadd.f32 %v1306, %v1405
      %v1428 = vadd.f32 %v1307, %v1407
      %v1429 = vadd.f32 %v1308, %v1409
      %v1430 = vadd.f32 %v1309, %v1411
      %v1431 = vadd.f32 %v1310, %v1413
      %v1432 = vadd.f32 %v1311, %v1415
      %v1433 = vadd.f32 %v1312, %v1417
      %v1435 = vperm.slane %v359, 0
      %v1437 = vadd.f32 %v825, %v1435
      %v1438 = vadd.f32 %v826, %v1435
      %v1439 = vadd.f32 %v827, %v1435
      %v1440 = vadd.f32 %v828, %v1435
      %v1441 = vadd.f32 %v829, %v1435
      %v1442 = vadd.f32 %v830, %v1435
      %v1443 = vadd.f32 %v831, %v1435
      %v1444 = vadd.f32 %v832, %v1435
      %1445 = vrot.lane.b32.xlu0 %v1435, 4
      %v1446 = vpop.permute.xlu0 %1445
      %v1448 = vadd.f32 %v994, %v1446
      %v1449 = vadd.f32 %v995, %v1446
      %v1450 = vadd.f32 %v996, %v1446
      %v1451 = vadd.f32 %v997, %v1446
      %v1452 = vadd.f32 %v998, %v1446
      %v1453 = vadd.f32 %v999, %v1446
      %v1454 = vadd.f32 %v1000, %v1446
      %v1455 = vadd.f32 %v1001, %v1446
      %v1456 = vsel %vm332, %v1437, %v1448
      %v1457 = vsel %vm332, %v1438, %v1449
      %v1458 = vsel %vm332, %v1439, %v1450
      %v1459 = vsel %vm332, %v1440, %v1451
      %v1460 = vsel %vm332, %v1441, %v1452
      %v1461 = vsel %vm332, %v1442, %v1453
      %v1462 = vsel %vm332, %v1443, %v1454
      %v1463 = vsel %vm332, %v1444, %v1455
      %vm1464 = vcmask 64512
      %1465 = vst.msk [vmem:[%s318] sm:$0xff] %vm1464, %v1456
      %1466 = vst.msk [vmem:[%s318 + $0x8] sm:$0xff] %vm1464, %v1457
      %1467 = vst.msk [vmem:[%s318 + $0x20] sm:$0xff] %vm1464, %v1458
      %1468 = vst.msk [vmem:[%s318 + $0x28] sm:$0xff] %vm1464, %v1459
      %1469 = vst.msk [vmem:[%s318 + $0x40] sm:$0xff] %vm1464, %v1460
      %1470 = vst.msk [vmem:[%s318 + $0x48] sm:$0xff] %vm1464, %v1461
      %1471 = vst.msk [vmem:[%s318 + $0x60] sm:$0xff] %vm1464, %v1462
      %1472 = vst.msk [vmem:[%s318 + $0x68] sm:$0xff] %vm1464, %v1463
      %v1473 = vadd.f32 %v1273, %v1446
      %v1474 = vadd.f32 %v1274, %v1446
      %v1475 = vadd.f32 %v1275, %v1446
      %v1476 = vadd.f32 %v1276, %v1446
      %v1477 = vadd.f32 %v1277, %v1446
      %v1478 = vadd.f32 %v1278, %v1446
      %v1479 = vadd.f32 %v1279, %v1446
      %v1480 = vadd.f32 %v1280, %v1446
      %1481 = vrot.lane.b32.xlu0 %v1435, 12
      %v1482 = vpop.permute.xlu0 %1481
      %v1484 = vadd.f32 %v1426, %v1482
      %v1485 = vadd.f32 %v1427, %v1482
      %v1486 = vadd.f32 %v1428, %v1482
      %v1487 = vadd.f32 %v1429, %v1482
      %v1488 = vadd.f32 %v1430, %v1482
      %v1489 = vadd.f32 %v1431, %v1482
      %v1490 = vadd.f32 %v1432, %v1482
      %v1491 = vadd.f32 %v1433, %v1482
      %1500 = vrot.lane.b32.xlu0 %v1473, 124
      %v1501 = vpop.permute.xlu0 %1500
      %1502 = vrot.lane.b32.xlu0 %v1474, 124
      %v1503 = vpop.permute.xlu0 %1502
      %1504 = vrot.lane.b32.xlu0 %v1475, 124
      %v1505 = vpop.permute.xlu0 %1504
      %1506 = vrot.lane.b32.xlu0 %v1476, 124
      %v1507 = vpop.permute.xlu0 %1506
      %1508 = vrot.lane.b32.xlu0 %v1477, 124
      %v1509 = vpop.permute.xlu0 %1508
      %1510 = vrot.lane.b32.xlu0 %v1478, 124
      %v1511 = vpop.permute.xlu0 %1510
      %1512 = vrot.lane.b32.xlu0 %v1479, 124
      %v1513 = vpop.permute.xlu0 %1512
      %1514 = vrot.lane.b32.xlu0 %v1480, 124
      %v1515 = vpop.permute.xlu0 %1514
      %1532 = vrot.lane.b32.xlu0 %v1484, 120
      %v1533 = vpop.permute.xlu0 %1532
      %1534 = vrot.lane.b32.xlu0 %v1485, 120
      %v1535 = vpop.permute.xlu0 %1534
      %1536 = vrot.lane.b32.xlu0 %v1486, 120
      %v1537 = vpop.permute.xlu0 %1536
      %1538 = vrot.lane.b32.xlu0 %v1487, 120
      %v1539 = vpop.permute.xlu0 %1538
      %1540 = vrot.lane.b32.xlu0 %v1488, 120
      %v1541 = vpop.permute.xlu0 %1540
      %1542 = vrot.lane.b32.xlu0 %v1489, 120
      %v1543 = vpop.permute.xlu0 %1542
      %1544 = vrot.lane.b32.xlu0 %v1490, 120
      %v1545 = vpop.permute.xlu0 %1544
      %1546 = vrot.lane.b32.xlu0 %v1491, 120
      %v1547 = vpop.permute.xlu0 %1546
      %v1556 = vsel %vm332, %v1501, %v1533
      %v1557 = vsel %vm332, %v1503, %v1535
      %v1558 = vsel %vm332, %v1505, %v1537
      %v1559 = vsel %vm332, %v1507, %v1539
      %v1560 = vsel %vm332, %v1509, %v1541
      %v1561 = vsel %vm332, %v1511, %v1543
      %v1562 = vsel %vm332, %v1513, %v1545
      %v1563 = vsel %vm332, %v1515, %v1547
      %s1564 = scalar_lea.vmem %s318, 16
      %1565 = vst.msk [vmem:[%s1564] sm:$0xff] %vm1464, %v1556
      %1566 = vst.msk [vmem:[%s1564 + $0x8] sm:$0xff] %vm1464, %v1557
      %1567 = vst.msk [vmem:[%s1564 + $0x20] sm:$0xff] %vm1464, %v1558
      %1568 = vst.msk [vmem:[%s1564 + $0x28] sm:$0xff] %vm1464, %v1559
      %1569 = vst.msk [vmem:[%s1564 + $0x40] sm:$0xff] %vm1464, %v1560
      %1570 = vst.msk [vmem:[%s1564 + $0x48] sm:$0xff] %vm1464, %v1561
      %1571 = vst.msk [vmem:[%s1564 + $0x60] sm:$0xff] %vm1464, %v1562
      %1572 = vst.msk [vmem:[%s1564 + $0x68] sm:$0xff] %vm1464, %v1563
      %s1573 = smul.u32 4, %s20
      %p1574 = scmp.lt.s32.totalorder %s19, 1
      %s1575 = scalar_select %p1574, %s19, 1
      %p1576 = scmp.lt.s32.totalorder %s1573, 15
      %s1577 = scalar_select %p1576, %s1573, 15
      %s1578 = smul.addr %s1577, 4
      %s1579 = smul.addr %s1575, 64
      %s1580 = sadd.s32 %s1578, %s1579
      %s1581 = smul.addr %s1580, 8
      %s1582 = scalar_lea.vmem %s4, %s1581
      // Predicated region
      $region37: #{tpu_custom_call.1} parent=35 // pred_check
        %p1583 = pneg %p149
      $region38: #{tpu_custom_call.1} parent=35 // pred_check_branch
        %1585 = sbr.rel (%p1583) target = $region40
      $region39: #{tpu_custom_call.1} parent=35 // pred_region
        %s1586 = smul.u32 4, %s20
      $region40: #{tpu_custom_call.1} parent=35 // pred_fallthru
        _
    $region36: #{tpu_custom_call.1} parent=5 // pred_fallthru
      _
    %p1587 = scmp.le.s32.totalorder 2, %s10
    // Predicated region
    $region41: #{tpu_custom_call.1} parent=5 // pred_check
      %p1588 = pneg %p1587
    $region42: #{tpu_custom_call.1} parent=5 // pred_check_branch
      %1590 = sbr.rel (%p1588) target = $region44
    $region43: #{tpu_custom_call.1} parent=5 // pred_region
      %s1591 = ssub.s32 %s10, 2
      // Predicated region
      $region45: #{tpu_custom_call.1} parent=43 // pred_check
        %p1592 = pneg %p155
      $region46: #{tpu_custom_call.1} parent=43 // pred_check_branch
        %1594 = sbr.rel (%p1592) target = $region48
      $region47: #{tpu_custom_call.1} parent=43 // pred_region
        %s1595 = smul.u32 4, %s22
        %p1596 = scmp.lt.s32.totalorder %s21, 1
        %s1597 = scalar_select %p1596, %s21, 1
        %p1598 = scmp.lt.s32.totalorder %s1595, 15
        %s1599 = scalar_select %p1598, %s1595, 15
        %s1600 = smul.addr %s1599, 4
        %s1601 = smul.addr %s1597, 64
        %s1602 = sadd.s32 %s1600, %s1601
        %s1603 = smul.addr %s1602, 8
        %s1604 = scalar_lea.vmem %s4, %s1603
      $region48: #{tpu_custom_call.1} parent=43 // pred_fallthru
        _
    $region44: #{tpu_custom_call.1} parent=5 // pred_fallthru
      _
  $region6: #{tpu_custom_call.1} parent=0 // loop_footer
    %s14 = sadd.s32 1, %s10
  $region7: #{tpu_custom_call.1} parent=0 // loop_footer_branch
    %9 = sbr.rel target = $region3
  $region8: #{tpu_custom_call.1} parent=0 // loop_exit
    _

</llo_original>
